<compile_context>
chip_gen: v6e
topology: v6e:2x2x1
jax: 0.10.0
libtpu: 0.0.40
codegen_flags: <defaults>
</compile_context>

<pallas_src>
import jax
import jax.numpy as jnp
from jax.experimental import pallas as pl
from jax.experimental.pallas import tpu as pltpu

LN_EPS = 1e-5  # PyTorch LayerNorm default eps


def _layernorm(x, gamma, beta):
    mu = jnp.mean(x, axis=-1, keepdims=True)
    var = jnp.mean((x - mu) ** 2, axis=-1, keepdims=True)
    return (x - mu) * jax.lax.rsqrt(var + LN_EPS) * gamma + beta


# ---------------------------------------------------------------------------
# Per-generation tuning (VMEM scoped budget + row-tile target)
# ---------------------------------------------------------------------------
def _select_tuning():
    cap = None
    try:
        cap = getattr(pltpu.get_tpu_info(), "vmem_capacity_bytes", None)
    except Exception:
        cap = None
    if cap is None:
        return 48 * 1024 * 1024, 256            # conservative, works everywhere
    if cap >= 100 * 1024 * 1024:                # v5e / v6e: 128 MiB VMEM
        return 100 * 1024 * 1024, 512
    return 40 * 1024 * 1024, 128                # v7x-class: 64 MiB per TensorCore


def _round_tile(t):
    return max(32, (t // 32) * 32)


def _stage1_tile(nc, target):
    return nc if nc <= target else _round_tile(target)


def _stage2_tile(nv, nc, h, vmem_limit, target):
    if nv <= target:
        return nv
    # double-buffered int8 A tile (2 * tv * 4*Nc bytes) dominates; keep it plus the
    # resident bf16 M and f32 weights within ~half the scoped budget.
    resident = 4 * nc * h * 2 + 8 * h * h * 4
    per_row = 2 * 4 * nc + 3 * 2 * h * 4
    avail = max(vmem_limit // 2 - resident, per_row * 32)
    return _round_tile(min(target, avail // per_row))


# ---------------------------------------------------------------------------
# Kernel 1: cst_send MLP   M = LayerNorm(ReLU(r_cst @ W1 + b1) @ W2)
# W2 / gamma / beta are pre-split into 4 column blocks so the output is emitted
# directly in block-major [4, tc, H] bf16 layout (no in-kernel lane slicing).
# ---------------------------------------------------------------------------
def cst_send_kernel(r_ref, w1_ref, b1_ref, w2b_ref, g1_ref, bt1_ref, out_ref):
    h = jnp.dot(r_ref[...], w1_ref[...], preferred_element_type=jnp.float32)
    h = jnp.maximum(h + b1_ref[...], 0.0)
    mb = [jnp.dot(h, w2b_ref[b], preferred_element_type=jnp.float32) for b in range(4)]
    hd = mb[0].shape[-1]
    n = 4.0 * hd
    # LayerNorm over the full 4H feature dim: combine stats across the 4 blocks.
    mu = sum(jnp.sum(m, axis=-1, keepdims=True) for m in mb) / n
    var = sum(jnp.sum((m - mu) ** 2, axis=-1, keepdims=True) for m in mb) / n
    inv = jax.lax.rsqrt(var + LN_EPS)
    for b in range(4):
        out_ref[b] = ((mb[b] - mu) * inv * g1_ref[b] + bt1_ref[b]).astype(out_ref.dtype)


# ---------------------------------------------------------------------------
# Kernel 2: aggregation (single bf16 MXU dot) + val_rec MLP + residual.
#   r_val = (A_int8 -> bf16) @ M_bf16      (f32 accumulation)
#   out   = LayerNorm(ReLU((x + scale*r_val) @ W3 + b3) @ W4) + x
# ---------------------------------------------------------------------------
def agg_valrec_kernel(m_ref, a_ref, scale_ref, x_ref,
                      w3_ref, b3_ref, w4_ref, g2_ref, bt2_ref, out_ref):
    a = a_ref[...].astype(jnp.bfloat16)                 # int8 -> bf16 (hides under DMA)
    r_val = jnp.dot(a, m_ref[...], preferred_element_type=jnp.float32)
    r_val = r_val * scale_ref[...]                      # [tv,1] broadcast (1/deg or 1)
    x = x_ref[...]
    xin = x + r_val
    h = jnp.dot(xin, w3_ref[...], preferred_element_type=jnp.float32)
    h = jnp.maximum(h + b3_ref[...], 0.0)
    y = jnp.dot(h, w4_ref[...], preferred_element_type=jnp.float32)
    out_ref[...] = _layernorm(y, g2_ref[...], bt2_ref[...]) + x


# ---------------------------------------------------------------------------
# Fused, E-independent adjacency (cache this when the graph is static!)
# A[v, blk*Nc + c] = #edges (cst c -> val v) using message block blk = 2*LE + PE.
# int8 counts are exact while per-(blk, v, c) multiplicity <= 127.
# ---------------------------------------------------------------------------
def build_cst2val_adjacency(cst_edges, LE, PE, num_cst, num_val, *, aggr="mean", use_PE=True):
    src, dst = cst_edges[0], cst_edges[1]
    blk = 2 * LE + (PE if use_PE else jnp.zeros_like(PE))
    col = blk * num_cst + src
    counts = jnp.zeros((num_val, 4 * num_cst), jnp.int32).at[dst, col].add(1)
    try:                                   # best-effort overflow check (skipped under jit)
        max_cnt = int(counts.max())
    except Exception:
        max_cnt = None
    if max_cnt is not None and max_cnt > 127:
        raise ValueError("edge multiplicity > 127 overflows the int8 adjacency")
    adj = counts.astype(jnp.int8)
    if aggr == "mean":
        deg = jnp.zeros((num_val,), jnp.float32).at[dst].add(1.0)
        scale = (1.0 / jnp.maximum(deg, 1.0))[:, None]
    else:  # sum
        scale = jnp.ones((num_val, 1), jnp.float32)
    return adj, scale


# ---------------------------------------------------------------------------
# Wrapper
# ---------------------------------------------------------------------------
def cst2val_forward(params, r_cst, x_val, cst_edges, LE, PE, num_val,
                    *, aggr="mean", use_PE=True, row_tile=None, adjacency=None):
    if aggr not in ("sum", "mean"):
        # TODO(synk): aggr == 'max' needs a masked-max reduction path (not a matmul).
        raise NotImplementedError("aggr='max' is not implemented in the Pallas path")

    Nc, H = r_cst.shape
    Nv = int(num_val)
    f32 = jnp.float32

    vmem_limit, default_target = _select_tuning()
    target = row_tile if row_tile is not None else default_target
    cp = pltpu.CompilerParams(dimension_semantics=("parallel",),
                              vmem_limit_bytes=int(vmem_limit))

    # Host-side one-time reshapes: split W2 / LN params into 4 column blocks
    # (free metadata-level work; hoist alongside the adjacency if params are static).
    w2b = jnp.transpose(params["w2"].reshape(H, 4, H), (1, 0, 2))       # [4, H, H]
    g1b = jnp.transpose(params["g1"].reshape(1, 4, H), (1, 0, 2))       # [4, 1, H]
    bt1b = jnp.transpose(params["bt1"].reshape(1, 4, H), (1, 0, 2))     # [4, 1, H]

    # ---- stage 1: cst_send MLP, output block-major [4, Nc, H] in bf16 -------
    tc = _stage1_tile(Nc, target)
    cost1 = pl.CostEstimate(
        flops=2 * Nc * H * H + 2 * Nc * H * 4 * H,
        transcendentals=Nc,
        bytes_accessed=Nc * H * 4 + (5 * H * H + 9 * H) * 4 + 4 * Nc * H * 2,
    )
    m = pl.pallas_call(
        cst_send_kernel,
        out_shape=jax.ShapeDtypeStruct((4, Nc, H), jnp.bfloat16),
        grid_spec=pltpu.PrefetchScalarGridSpec(
            num_scalar_prefetch=0,
            grid=(pl.cdiv(Nc, tc),),
            in_specs=[
                pl.BlockSpec((tc, H), lambda i: (i, 0)),          # r_cst row tile
                pl.BlockSpec((H, H), lambda i: (0, 0)),           # W1 (resident)
                pl.BlockSpec((1, H), lambda i: (0, 0)),           # b1
                pl.BlockSpec((4, H, H), lambda i: (0, 0, 0)),     # W2 column blocks
                pl.BlockSpec((4, 1, H), lambda i: (0, 0, 0)),     # LN gamma blocks
                pl.BlockSpec((4, 1, H), lambda i: (0, 0, 0)),     # LN beta blocks
            ],
            out_specs=pl.BlockSpec((4, tc, H), lambda i: (0, i, 0)),
        ),
        compiler_params=cp,
        cost_estimate=cost1,
    )(r_cst, params["w1"], params["b1"], w2b, g1b, bt1b)
    m_flat = m.reshape(4 * Nc, H)          # leading-dim merge: no relayout

    # ---- glue: dense int8 adjacency + degree scale (O(E) build, cacheable) ---
    if adjacency is None:
        adjacency = build_cst2val_adjacency(cst_edges, LE, PE, Nc, Nv,
                                            aggr=aggr, use_PE=use_PE)
    adj, scale = adjacency

    # ---- stage 2: aggregation + val_rec (row-tiled over value nodes) --------
    tv = _stage2_tile(Nv, Nc, H, vmem_limit, target)
    cost2 = pl.CostEstimate(
        flops=2 * Nv * 4 * Nc * H + 4 * Nv * H * H,
        transcendentals=Nv,
        bytes_accessed=Nv * 4 * Nc + 4 * Nc * H * 2 + 2 * Nv * H * 4 + Nv * 4
                       + (2 * H * H + 3 * H) * 4,
    )
    # NOTE: H=32 uses only 32 of the MXU output lanes; contraction depth K=4*Nc
    # carries utilization instead (padding H is a model-level decision).
    out = pl.pallas_call(
        agg_valrec_kernel,
        out_shape=jax.ShapeDtypeStruct((Nv, H), f32),
        grid_spec=pltpu.PrefetchScalarGridSpec(
            num_scalar_prefetch=0,
            grid=(pl.cdiv(Nv, tv),),
            in_specs=[
                pl.BlockSpec((4 * Nc, H), lambda i: (0, 0)),      # M (bf16, resident)
                pl.BlockSpec((tv, 4 * Nc), lambda i: (i, 0)),     # A row tile (int8)
                pl.BlockSpec((tv, 1), lambda i: (i, 0)),          # degree scale tile
                pl.BlockSpec((tv, H), lambda i: (i, 0)),          # x_val row tile
                pl.BlockSpec((H, H), lambda i: (0, 0)),           # W3 (resident)
                pl.BlockSpec((1, H), lambda i: (0, 0)),           # b3
                pl.BlockSpec((H, H), lambda i: (0, 0)),           # W4
                pl.BlockSpec((1, H), lambda i: (0, 0)),           # LN gamma
                pl.BlockSpec((1, H), lambda i: (0, 0)),           # LN beta
            ],
            out_specs=pl.BlockSpec((tv, H), lambda i: (i, 0)),
        ),
        compiler_params=cp,
        cost_estimate=cost2,
    )(m_flat, adj, scale, x_val,
      params["w3"], params["b3"], params["w4"], params["g2"], params["bt2"])
    return out


# ---------------------------------------------------------------------------
# Pure-JAX reference for verification (quantize_m=True mimics the bf16 message
# rounding the kernel performs between its two stages).
# ---------------------------------------------------------------------------
def reference(params, r_cst, x_val, cst_edges, LE, PE, num_val,
              *, aggr="mean", use_PE=True, quantize_m=False):
    H = r_cst.shape[-1]
    Nc = r_cst.shape[0]
    h = jnp.maximum(r_cst @ params["w1"] + params["b1"], 0.0)
    m = _layernorm(h @ params["w2"], params["g1"], params["bt1"])
    if quantize_m:
        m = m.astype(jnp.bfloat16).astype(jnp.float32)
    m_cst = m.reshape(4 * Nc, H)
    out_idx = 4 * cst_edges[0] + 2 * LE + (PE if use_PE else 0 * PE)
    in_idx = cst_edges[1]
    msg = m_cst[out_idx]
    r_val = jax.ops.segment_sum(msg, in_idx, num_segments=num_val)
    if aggr == "mean":
        cnt = jax.ops.segment_sum(jnp.ones((in_idx.shape[0],), jnp.float32), in_idx,
                                  num_segments=num_val)[:, None]
        r_val = r_val / jnp.maximum(cnt, 1.0)
    xin = x_val + r_val
    h2 = jnp.maximum(xin @ params["w3"] + params["b3"], 0.0)
    y = h2 @ params["w4"]
    return _layernorm(y, params["g2"], params["bt2"]) + x_val


# ---------------------------------------------------------------------------
if __name__ == "__main__":
    H, Nc, Nv, E = 32, 128, 128, 512
    aggr = "mean"

    key = jax.random.PRNGKey(0)
    ks = jax.random.split(key, 12)

    # Deterministic synthetic parameters (PyTorch LayerNorm defaults: gamma=1, beta=0)
    params = {
        "w1": 0.1 * jax.random.normal(ks[0], (H, H), jnp.float32),
        "b1": 0.1 * jax.random.normal(ks[1], (1, H), jnp.float32),
        "w2": 0.1 * jax.random.normal(ks[2], (H, 4 * H), jnp.float32),
        "g1": jnp.ones((1, 4 * H), jnp.float32),
        "bt1": jnp.zeros((1, 4 * H), jnp.float32),
        "w3": 0.1 * jax.random.normal(ks[3], (H, H), jnp.float32),
        "b3": 0.1 * jax.random.normal(ks[4], (1, H), jnp.float32),
        "w4": 0.1 * jax.random.normal(ks[5], (H, H), jnp.float32),
        "g2": jnp.ones((1, H), jnp.float32),
        "bt2": jnp.zeros((1, H), jnp.float32),
    }

    # Inputs (graph data)
    r_cst = jax.random.normal(ks[6], (Nc, H), jnp.float32)
    x_val = jax.random.normal(ks[7], (Nv, H), jnp.float32)
    cst_src = jax.random.randint(ks[8], (E,), 0, Nc)
    val_dst = jax.random.randint(ks[9], (E,), 0, Nv)
    cst_edges = jnp.stack([cst_src, val_dst], axis=0)             # [2, E]
    LE = jax.random.randint(ks[10], (E,), 0, 2)
    PE = jax.random.randint(ks[11], (E,), 0, 2)

    # row_tile=64 -> grid of 2 on both kernels (exercises the tiled/pipelined path)
    out = cst2val_forward(params, r_cst, x_val, cst_edges, LE, PE, Nv,
                          aggr=aggr, use_PE=True, row_tile=64)
    out = jax.block_until_ready(out)
    assert out.shape == (Nv, H)

    # (a) tight check against a reference that uses the same bf16 message rounding
    ref_q = reference(params, r_cst, x_val, cst_edges, LE, PE, Nv,
                      aggr=aggr, use_PE=True, quantize_m=True)
    err_q = float(jnp.max(jnp.abs(out - ref_q)))
    assert jnp.allclose(out, ref_q, atol=2e-3, rtol=2e-3), ("vs bf16-m reference", err_q)

    # (b) looser check against the exact f32 reference (bounds the bf16 quantization)
    ref_f = reference(params, r_cst, x_val, cst_edges, LE, PE, Nv,
                      aggr=aggr, use_PE=True, quantize_m=False)
    err_f = float(jnp.max(jnp.abs(out - ref_f)))
    assert jnp.allclose(out, ref_f, atol=5e-2, rtol=5e-2), ("vs f32 reference", err_f)

    print("KERNEL_OK")
</pallas_src>

<mosaic_0001>
module attributes {stable_mosaic.version = 11 : i64} {
  func.func @cst_send_kernel(%arg0: i32, %arg1: memref<64x32xf32, #tpu.memory_space<vmem>>, %arg2: memref<32x32xf32, #tpu.memory_space<vmem>>, %arg3: memref<1x32xf32, #tpu.memory_space<vmem>>, %arg4: memref<4x32x32xf32, #tpu.memory_space<vmem>>, %arg5: memref<4x1x32xf32, #tpu.memory_space<vmem>>, %arg6: memref<4x1x32xf32, #tpu.memory_space<vmem>>, %arg7: memref<4x64x32xbf16, #tpu.memory_space<vmem>>) attributes {dimension_semantics = [#tpu.dimension_semantics<parallel>], iteration_bounds = array<i64: 2>, scalar_prefetch = 0 : i64, scratch_operands = 0 : i64, tpu.core_type = #tpu.core_type<tc>, window_params = [{transform_indices = @transform_0, window_bounds = array<i64: 64, 32>}, {pipeline_mode = #tpu.pipeline_mode<synchronous>, transform_indices = @transform_1, window_bounds = array<i64: 32, 32>}, {pipeline_mode = #tpu.pipeline_mode<synchronous>, transform_indices = @transform_2, window_bounds = array<i64: 1, 32>}, {pipeline_mode = #tpu.pipeline_mode<synchronous>, transform_indices = @transform_3, window_bounds = array<i64: 4, 32, 32>}, {pipeline_mode = #tpu.pipeline_mode<synchronous>, transform_indices = @transform_4, window_bounds = array<i64: 4, 1, 32>}, {pipeline_mode = #tpu.pipeline_mode<synchronous>, transform_indices = @transform_5, window_bounds = array<i64: 4, 1, 32>}, {transform_indices = @transform_6, window_bounds = array<i64: 4, 64, 32>}]} {
    %c0 = arith.constant 0 : index
    %c0_0 = arith.constant 0 : index
    %0 = vector.load %arg1[%c0, %c0_0] : memref<64x32xf32, #tpu.memory_space<vmem>>, vector<64x32xf32>
    %c0_1 = arith.constant 0 : index
    %c0_2 = arith.constant 0 : index
    %1 = vector.load %arg2[%c0_1, %c0_2] : memref<32x32xf32, #tpu.memory_space<vmem>>, vector<32x32xf32>
    %cst = arith.constant dense<0.000000e+00> : vector<64x32xf32>
    %2 = tpu.matmul %0, %1, %cst {dimension_numbers = #tpu.dot_dimension_numbers<[1], [0], [0], [1], [0, 0, 1, 1], [], []>} : vector<64x32xf32>, vector<32x32xf32>, vector<64x32xf32> -> vector<64x32xf32>
    %c0_3 = arith.constant 0 : index
    %c0_4 = arith.constant 0 : index
    %3 = vector.load %arg3[%c0_3, %c0_4] : memref<1x32xf32, #tpu.memory_space<vmem>>, vector<1x32xf32>
    %4 = vector.broadcast %3 : vector<1x32xf32> to vector<64x32xf32>
    %5 = arith.addf %2, %4 : vector<64x32xf32>
    %cst_5 = arith.constant 0.000000e+00 : f32
    %6 = vector.broadcast %cst_5 : f32 to vector<64x32xf32>
    %7 = arith.maximumf %5, %6 : vector<64x32xf32>
    %c0_6 = arith.constant 0 : index
    %c0_7 = arith.constant 0 : index
    %c0_8 = arith.constant 0 : index
    %8 = vector.load %arg4[%c0_6, %c0_7, %c0_8] : memref<4x32x32xf32, #tpu.memory_space<vmem>>, vector<1x32x32xf32>
    %9 = vector.shape_cast %8 : vector<1x32x32xf32> to vector<32x32xf32>
    %cst_9 = arith.constant dense<0.000000e+00> : vector<64x32xf32>
    %10 = tpu.matmul %7, %9, %cst_9 {dimension_numbers = #tpu.dot_dimension_numbers<[1], [0], [0], [1], [0, 0, 1, 1], [], []>} : vector<64x32xf32>, vector<32x32xf32>, vector<64x32xf32> -> vector<64x32xf32>
    %c1 = arith.constant 1 : index
    %c0_10 = arith.constant 0 : index
    %c0_11 = arith.constant 0 : index
    %11 = vector.load %arg4[%c1, %c0_10, %c0_11] : memref<4x32x32xf32, #tpu.memory_space<vmem>>, vector<1x32x32xf32>
    %12 = vector.shape_cast %11 : vector<1x32x32xf32> to vector<32x32xf32>
    %cst_12 = arith.constant dense<0.000000e+00> : vector<64x32xf32>
    %13 = tpu.matmul %7, %12, %cst_12 {dimension_numbers = #tpu.dot_dimension_numbers<[1], [0], [0], [1], [0, 0, 1, 1], [], []>} : vector<64x32xf32>, vector<32x32xf32>, vector<64x32xf32> -> vector<64x32xf32>
    %c2 = arith.constant 2 : index
    %c0_13 = arith.constant 0 : index
    %c0_14 = arith.constant 0 : index
    %14 = vector.load %arg4[%c2, %c0_13, %c0_14] : memref<4x32x32xf32, #tpu.memory_space<vmem>>, vector<1x32x32xf32>
    %15 = vector.shape_cast %14 : vector<1x32x32xf32> to vector<32x32xf32>
    %cst_15 = arith.constant dense<0.000000e+00> : vector<64x32xf32>
    %16 = tpu.matmul %7, %15, %cst_15 {dimension_numbers = #tpu.dot_dimension_numbers<[1], [0], [0], [1], [0, 0, 1, 1], [], []>} : vector<64x32xf32>, vector<32x32xf32>, vector<64x32xf32> -> vector<64x32xf32>
    %c3 = arith.constant 3 : index
    %c0_16 = arith.constant 0 : index
    %c0_17 = arith.constant 0 : index
    %17 = vector.load %arg4[%c3, %c0_16, %c0_17] : memref<4x32x32xf32, #tpu.memory_space<vmem>>, vector<1x32x32xf32>
    %18 = vector.shape_cast %17 : vector<1x32x32xf32> to vector<32x32xf32>
    %cst_18 = arith.constant dense<0.000000e+00> : vector<64x32xf32>
    %19 = tpu.matmul %7, %18, %cst_18 {dimension_numbers = #tpu.dot_dimension_numbers<[1], [0], [0], [1], [0, 0, 1, 1], [], []>} : vector<64x32xf32>, vector<32x32xf32>, vector<64x32xf32> -> vector<64x32xf32>
    %cst_19 = arith.constant dense<0.000000e+00> : vector<64xf32>
    %20 = vector.multi_reduction <add>, %10, %cst_19 [1] : vector<64x32xf32> to vector<64xf32>
    %21 = vector.shape_cast %20 : vector<64xf32> to vector<64x1xf32>
    %cst_20 = arith.constant 0.000000e+00 : f32
    %22 = vector.broadcast %cst_20 : f32 to vector<64x1xf32>
    %23 = arith.addf %22, %21 : vector<64x1xf32>
    %cst_21 = arith.constant dense<0.000000e+00> : vector<64xf32>
    %24 = vector.multi_reduction <add>, %13, %cst_21 [1] : vector<64x32xf32> to vector<64xf32>
    %25 = vector.shape_cast %24 : vector<64xf32> to vector<64x1xf32>
    %26 = arith.addf %23, %25 : vector<64x1xf32>
    %cst_22 = arith.constant dense<0.000000e+00> : vector<64xf32>
    %27 = vector.multi_reduction <add>, %16, %cst_22 [1] : vector<64x32xf32> to vector<64xf32>
    %28 = vector.shape_cast %27 : vector<64xf32> to vector<64x1xf32>
    %29 = arith.addf %26, %28 : vector<64x1xf32>
    %cst_23 = arith.constant dense<0.000000e+00> : vector<64xf32>
    %30 = vector.multi_reduction <add>, %19, %cst_23 [1] : vector<64x32xf32> to vector<64xf32>
    %31 = vector.shape_cast %30 : vector<64xf32> to vector<64x1xf32>
    %32 = arith.addf %29, %31 : vector<64x1xf32>
    %cst_24 = arith.constant 1.280000e+02 : f32
    %33 = vector.broadcast %cst_24 : f32 to vector<64x1xf32>
    %34 = arith.divf %32, %33 : vector<64x1xf32>
    %35 = vector.broadcast %34 : vector<64x1xf32> to vector<64x32xf32>
    %36 = arith.subf %10, %35 : vector<64x32xf32>
    %37 = arith.mulf %36, %36 : vector<64x32xf32>
    %cst_25 = arith.constant dense<0.000000e+00> : vector<64xf32>
    %38 = vector.multi_reduction <add>, %37, %cst_25 [1] : vector<64x32xf32> to vector<64xf32>
    %39 = vector.shape_cast %38 : vector<64xf32> to vector<64x1xf32>
    %cst_26 = arith.constant 0.000000e+00 : f32
    %40 = vector.broadcast %cst_26 : f32 to vector<64x1xf32>
    %41 = arith.addf %40, %39 : vector<64x1xf32>
    %42 = vector.broadcast %34 : vector<64x1xf32> to vector<64x32xf32>
    %43 = arith.subf %13, %42 : vector<64x32xf32>
    %44 = arith.mulf %43, %43 : vector<64x32xf32>
    %cst_27 = arith.constant dense<0.000000e+00> : vector<64xf32>
    %45 = vector.multi_reduction <add>, %44, %cst_27 [1] : vector<64x32xf32> to vector<64xf32>
    %46 = vector.shape_cast %45 : vector<64xf32> to vector<64x1xf32>
    %47 = arith.addf %41, %46 : vector<64x1xf32>
    %48 = vector.broadcast %34 : vector<64x1xf32> to vector<64x32xf32>
    %49 = arith.subf %16, %48 : vector<64x32xf32>
    %50 = arith.mulf %49, %49 : vector<64x32xf32>
    %cst_28 = arith.constant dense<0.000000e+00> : vector<64xf32>
    %51 = vector.multi_reduction <add>, %50, %cst_28 [1] : vector<64x32xf32> to vector<64xf32>
    %52 = vector.shape_cast %51 : vector<64xf32> to vector<64x1xf32>
    %53 = arith.addf %47, %52 : vector<64x1xf32>
    %54 = vector.broadcast %34 : vector<64x1xf32> to vector<64x32xf32>
    %55 = arith.subf %19, %54 : vector<64x32xf32>
    %56 = arith.mulf %55, %55 : vector<64x32xf32>
    %cst_29 = arith.constant dense<0.000000e+00> : vector<64xf32>
    %57 = vector.multi_reduction <add>, %56, %cst_29 [1] : vector<64x32xf32> to vector<64xf32>
    %58 = vector.shape_cast %57 : vector<64xf32> to vector<64x1xf32>
    %59 = arith.addf %53, %58 : vector<64x1xf32>
    %cst_30 = arith.constant 1.280000e+02 : f32
    %60 = vector.broadcast %cst_30 : f32 to vector<64x1xf32>
    %61 = arith.divf %59, %60 : vector<64x1xf32>
    %cst_31 = arith.constant 9.99999974E-6 : f32
    %62 = vector.broadcast %cst_31 : f32 to vector<64x1xf32>
    %63 = arith.addf %61, %62 : vector<64x1xf32>
    %64 = math.rsqrt %63 : vector<64x1xf32>
    %65 = vector.broadcast %34 : vector<64x1xf32> to vector<64x32xf32>
    %66 = arith.subf %10, %65 : vector<64x32xf32>
    %67 = vector.broadcast %64 : vector<64x1xf32> to vector<64x32xf32>
    %68 = arith.mulf %66, %67 : vector<64x32xf32>
    %c0_32 = arith.constant 0 : index
    %c0_33 = arith.constant 0 : index
    %c0_34 = arith.constant 0 : index
    %69 = vector.load %arg5[%c0_32, %c0_33, %c0_34] : memref<4x1x32xf32, #tpu.memory_space<vmem>>, vector<1x1x32xf32>
    %70 = vector.shape_cast %69 : vector<1x1x32xf32> to vector<1x32xf32>
    %71 = vector.broadcast %70 : vector<1x32xf32> to vector<64x32xf32>
    %72 = arith.mulf %68, %71 : vector<64x32xf32>
    %c0_35 = arith.constant 0 : index
    %c0_36 = arith.constant 0 : index
    %c0_37 = arith.constant 0 : index
    %73 = vector.load %arg6[%c0_35, %c0_36, %c0_37] : memref<4x1x32xf32, #tpu.memory_space<vmem>>, vector<1x1x32xf32>
    %74 = vector.shape_cast %73 : vector<1x1x32xf32> to vector<1x32xf32>
    %75 = vector.broadcast %74 : vector<1x32xf32> to vector<64x32xf32>
    %76 = arith.addf %72, %75 : vector<64x32xf32>
    %77 = arith.truncf %76 : vector<64x32xf32> to vector<64x32xbf16>
    %c0_38 = arith.constant 0 : index
    %c0_39 = arith.constant 0 : index
    %c0_40 = arith.constant 0 : index
    %78 = vector.load %arg7[%c0_38, %c0_39, %c0_40] : memref<4x64x32xbf16, #tpu.memory_space<vmem>>, vector<1x64x32xbf16>
    %79 = vector.shape_cast %78 : vector<1x64x32xbf16> to vector<64x32xbf16>
    %80 = vector.shape_cast %77 : vector<64x32xbf16> to vector<1x64x32xbf16>
    tpu.vector_store %arg7[%c0_38, %c0_39, %c0_40], %80 {strides = array<i32>} : memref<4x64x32xbf16, #tpu.memory_space<vmem>>, vector<1x64x32xbf16>,
    %81 = vector.broadcast %34 : vector<64x1xf32> to vector<64x32xf32>
    %82 = arith.subf %13, %81 : vector<64x32xf32>
    %83 = vector.broadcast %64 : vector<64x1xf32> to vector<64x32xf32>
    %84 = arith.mulf %82, %83 : vector<64x32xf32>
    %c1_41 = arith.constant 1 : index
    %c0_42 = arith.constant 0 : index
    %c0_43 = arith.constant 0 : index
    %85 = vector.load %arg5[%c1_41, %c0_42, %c0_43] : memref<4x1x32xf32, #tpu.memory_space<vmem>>, vector<1x1x32xf32>
    %86 = vector.shape_cast %85 : vector<1x1x32xf32> to vector<1x32xf32>
    %87 = vector.broadcast %86 : vector<1x32xf32> to vector<64x32xf32>
    %88 = arith.mulf %84, %87 : vector<64x32xf32>
    %c1_44 = arith.constant 1 : index
    %c0_45 = arith.constant 0 : index
    %c0_46 = arith.constant 0 : index
    %89 = vector.load %arg6[%c1_44, %c0_45, %c0_46] : memref<4x1x32xf32, #tpu.memory_space<vmem>>, vector<1x1x32xf32>
    %90 = vector.shape_cast %89 : vector<1x1x32xf32> to vector<1x32xf32>
    %91 = vector.broadcast %90 : vector<1x32xf32> to vector<64x32xf32>
    %92 = arith.addf %88, %91 : vector<64x32xf32>
    %93 = arith.truncf %92 : vector<64x32xf32> to vector<64x32xbf16>
    %c1_47 = arith.constant 1 : index
    %c0_48 = arith.constant 0 : index
    %c0_49 = arith.constant 0 : index
    %94 = vector.load %arg7[%c1_47, %c0_48, %c0_49] : memref<4x64x32xbf16, #tpu.memory_space<vmem>>, vector<1x64x32xbf16>
    %95 = vector.shape_cast %94 : vector<1x64x32xbf16> to vector<64x32xbf16>
    %96 = vector.shape_cast %93 : vector<64x32xbf16> to vector<1x64x32xbf16>
    tpu.vector_store %arg7[%c1_47, %c0_48, %c0_49], %96 {strides = array<i32>} : memref<4x64x32xbf16, #tpu.memory_space<vmem>>, vector<1x64x32xbf16>,
    %97 = vector.broadcast %34 : vector<64x1xf32> to vector<64x32xf32>
    %98 = arith.subf %16, %97 : vector<64x32xf32>
    %99 = vector.broadcast %64 : vector<64x1xf32> to vector<64x32xf32>
    %100 = arith.mulf %98, %99 : vector<64x32xf32>
    %c2_50 = arith.constant 2 : index
    %c0_51 = arith.constant 0 : index
    %c0_52 = arith.constant 0 : index
    %101 = vector.load %arg5[%c2_50, %c0_51, %c0_52] : memref<4x1x32xf32, #tpu.memory_space<vmem>>, vector<1x1x32xf32>
    %102 = vector.shape_cast %101 : vector<1x1x32xf32> to vector<1x32xf32>
    %103 = vector.broadcast %102 : vector<1x32xf32> to vector<64x32xf32>
    %104 = arith.mulf %100, %103 : vector<64x32xf32>
    %c2_53 = arith.constant 2 : index
    %c0_54 = arith.constant 0 : index
    %c0_55 = arith.constant 0 : index
    %105 = vector.load %arg6[%c2_53, %c0_54, %c0_55] : memref<4x1x32xf32, #tpu.memory_space<vmem>>, vector<1x1x32xf32>
    %106 = vector.shape_cast %105 : vector<1x1x32xf32> to vector<1x32xf32>
    %107 = vector.broadcast %106 : vector<1x32xf32> to vector<64x32xf32>
    %108 = arith.addf %104, %107 : vector<64x32xf32>
    %109 = arith.truncf %108 : vector<64x32xf32> to vector<64x32xbf16>
    %c2_56 = arith.constant 2 : index
    %c0_57 = arith.constant 0 : index
    %c0_58 = arith.constant 0 : index
    %110 = vector.load %arg7[%c2_56, %c0_57, %c0_58] : memref<4x64x32xbf16, #tpu.memory_space<vmem>>, vector<1x64x32xbf16>
    %111 = vector.shape_cast %110 : vector<1x64x32xbf16> to vector<64x32xbf16>
    %112 = vector.shape_cast %109 : vector<64x32xbf16> to vector<1x64x32xbf16>
    tpu.vector_store %arg7[%c2_56, %c0_57, %c0_58], %112 {strides = array<i32>} : memref<4x64x32xbf16, #tpu.memory_space<vmem>>, vector<1x64x32xbf16>,
    %113 = vector.broadcast %34 : vector<64x1xf32> to vector<64x32xf32>
    %114 = arith.subf %19, %113 : vector<64x32xf32>
    %115 = vector.broadcast %64 : vector<64x1xf32> to vector<64x32xf32>
    %116 = arith.mulf %114, %115 : vector<64x32xf32>
    %c3_59 = arith.constant 3 : index
    %c0_60 = arith.constant 0 : index
    %c0_61 = arith.constant 0 : index
    %117 = vector.load %arg5[%c3_59, %c0_60, %c0_61] : memref<4x1x32xf32, #tpu.memory_space<vmem>>, vector<1x1x32xf32>
    %118 = vector.shape_cast %117 : vector<1x1x32xf32> to vector<1x32xf32>
    %119 = vector.broadcast %118 : vector<1x32xf32> to vector<64x32xf32>
    %120 = arith.mulf %116, %119 : vector<64x32xf32>
    %c3_62 = arith.constant 3 : index
    %c0_63 = arith.constant 0 : index
    %c0_64 = arith.constant 0 : index
    %121 = vector.load %arg6[%c3_62, %c0_63, %c0_64] : memref<4x1x32xf32, #tpu.memory_space<vmem>>, vector<1x1x32xf32>
    %122 = vector.shape_cast %121 : vector<1x1x32xf32> to vector<1x32xf32>
    %123 = vector.broadcast %122 : vector<1x32xf32> to vector<64x32xf32>
    %124 = arith.addf %120, %123 : vector<64x32xf32>
    %125 = arith.truncf %124 : vector<64x32xf32> to vector<64x32xbf16>
    %c3_65 = arith.constant 3 : index
    %c0_66 = arith.constant 0 : index
    %c0_67 = arith.constant 0 : index
    %126 = vector.load %arg7[%c3_65, %c0_66, %c0_67] : memref<4x64x32xbf16, #tpu.memory_space<vmem>>, vector<1x64x32xbf16>
    %127 = vector.shape_cast %126 : vector<1x64x32xbf16> to vector<64x32xbf16>
    %128 = vector.shape_cast %125 : vector<64x32xbf16> to vector<1x64x32xbf16>
    tpu.vector_store %arg7[%c3_65, %c0_66, %c0_67], %128 {strides = array<i32>} : memref<4x64x32xbf16, #tpu.memory_space<vmem>>, vector<1x64x32xbf16>,
    return
  }
  func.func @transform_0(%arg0: i32) -> (i32, i32) {
    %c0_i32 = arith.constant 0 : i32
    %c0_i32_0 = arith.constant 0 : i32
    return %arg0, %c0_i32 : i32, i32
  }
  func.func @transform_1(%arg0: i32) -> (i32, i32) {
    %c0_i32 = arith.constant 0 : i32
    %c0_i32_0 = arith.constant 0 : i32
    %c0_i32_1 = arith.constant 0 : i32
    return %c0_i32, %c0_i32_0 : i32, i32
  }
  func.func @transform_2(%arg0: i32) -> (i32, i32) {
    %c0_i32 = arith.constant 0 : i32
    %c0_i32_0 = arith.constant 0 : i32
    %c0_i32_1 = arith.constant 0 : i32
    return %c0_i32, %c0_i32_0 : i32, i32
  }
  func.func @transform_3(%arg0: i32) -> (i32, i32, i32) {
    %c0_i32 = arith.constant 0 : i32
    %c0_i32_0 = arith.constant 0 : i32
    %c0_i32_1 = arith.constant 0 : i32
    %c0_i32_2 = arith.constant 0 : i32
    return %c0_i32, %c0_i32_0, %c0_i32_1 : i32, i32, i32
  }
  func.func @transform_4(%arg0: i32) -> (i32, i32, i32) {
    %c0_i32 = arith.constant 0 : i32
    %c0_i32_0 = arith.constant 0 : i32
    %c0_i32_1 = arith.constant 0 : i32
    %c0_i32_2 = arith.constant 0 : i32
    return %c0_i32, %c0_i32_0, %c0_i32_1 : i32, i32, i32
  }
  func.func @transform_5(%arg0: i32) -> (i32, i32, i32) {
    %c0_i32 = arith.constant 0 : i32
    %c0_i32_0 = arith.constant 0 : i32
    %c0_i32_1 = arith.constant 0 : i32
    %c0_i32_2 = arith.constant 0 : i32
    return %c0_i32, %c0_i32_0, %c0_i32_1 : i32, i32, i32
  }
  func.func @transform_6(%arg0: i32) -> (i32, i32, i32) {
    %c0_i32 = arith.constant 0 : i32
    %c0_i32_0 = arith.constant 0 : i32
    %c0_i32_1 = arith.constant 0 : i32
    return %c0_i32, %arg0, %c0_i32_0 : i32, i32, i32
  }
}

</mosaic_0001>

<llo_original>
// kernel: tpu_custom_call.1
$region0: #{tpu_custom_call.1}
  #allocation0 [shape = 'u32[]', space=smem, size = 0x4, offset = 0x4, fixed_abs, tag = 'smem constant byte address 0x4 - core index']
  #allocation1 [shape = 'u32[144,128]{1,0:T(1,128)}', space=vmem, size = 0x12000, scoped, tag = 'internal scratch']
  %s0 = inlined_call_operand.vmem [shape: f32[128,32], index: 0, kind: input, shape index: {}]
  %s1 = inlined_call_operand.vmem [shape: f32[32,32], index: 1, kind: input, shape index: {}]
  %s2 = inlined_call_operand.vmem [shape: f32[1,32], index: 2, kind: input, shape index: {}]
  %s3 = inlined_call_operand.vmem [shape: f32[4,32,32], index: 3, kind: input, shape index: {}]
  %s4 = inlined_call_operand.vmem [shape: f32[4,1,32], index: 4, kind: input, shape index: {}]
  %s5 = inlined_call_operand.vmem [shape: f32[4,1,32], index: 5, kind: input, shape index: {}]
  %s6 = inlined_call_operand.vmem [shape: bf16[4,128,32], index: 6, kind: output, shape index: {}]
  %s7 = sld [smem:[#allocation0]]
  $region94: #{tpu_custom_call.1} parent=0
    _
  %s9 = ssub.s32 1, %s7
  %s10 = scalar_select 0, %s9, %s7
  $region1: #{tpu_custom_call.1} parent=0
    #allocation2 [shape = 'u8[131072]{0}', space=vmem, size = 0x20000, scoped, tag = 'output window, operand 0']
    loop: start=0, step=1, limit=4
    $region2: #{tpu_custom_call.1} parent=1 // loop_pre_header
      _
    $region3: #{tpu_custom_call.1} parent=1 // loop_header
      %s12 = sphi 0, %s16
      %p13 = scmp.ge.s32.totalorder %s12, 4
      %s22 = sphi 0, %s24
      %s25 = sphi 0, %s22
      %s26 = sphi 0, %s25
      %s42 = sphi 0, %s26
      %s46 = sphi 0, %s46
      %s48 = sphi 0, %s46
      %s49 = sphi 0, %s48
      %s63 = sphi 0, %s49
      %s67 = sphi 0, %s67
      %s69 = sphi 0, %s67
      %s70 = sphi 0, %s69
      %s84 = sphi 0, %s70
      %s88 = sphi 0, %s88
      %s90 = sphi 0, %s88
      %s91 = sphi 0, %s90
      %s105 = sphi 0, %s91
      %s109 = sphi 0, %s109
      %s111 = sphi 0, %s109
      %s112 = sphi 0, %s111
      %s126 = sphi 0, %s112
      %s130 = sphi 0, %s130
      %s132 = sphi 0, %s130
      %s133 = sphi 0, %s132
      %s147 = sphi 0, %s133
      %s153 = sphi 0, %s155
      %s156 = sphi 0, %s153
      %s157 = sphi 0, %s156
      %s173 = sphi 0, %s157
    $region4: #{tpu_custom_call.1} parent=1 // loop_header_branch
      %15 = sbr.rel (%p13) target = $region8
    $region5: #{tpu_custom_call.1} parent=1 // loop_body
      %s17 = ssub.s32 %s12, 1
      %s18 = ssub.s32 %s12, 2
      %s19 = sadd.s32 %s12, 1
      %s20 = ssub.s32 %s12, %s19
      %p21 = scmp.eq.s32.totalorder %s20, 0
      %s23 = sadd.s32 %s22, 1
      %s24 = scalar_select %p21, %s22, %s23
      %p27 = pneg %p21
      %p28 = scmp.eq.s32.totalorder %s12, 1
      %p29 = por %p27, %p28
      %p30 = scmp.ne.s32.totalorder %s22, %s25
      %p31 = scmp.eq.s32.totalorder %s12, 0
      %p32 = por %p30, %p31
      %p33 = scmp.ne.s32.totalorder %s22, %s25
      %p34 = scmp.eq.s32.totalorder %s17, 1
      %p35 = por %p33, %p34
      %p36 = scmp.ne.s32.totalorder %s25, %s26
      %p37 = scmp.eq.s32.totalorder %s17, 0
      %p38 = por %p36, %p37
      %p39 = scmp.ne.s32.totalorder %s25, %s26
      %p40 = scmp.eq.s32.totalorder %s18, 1
      %p41 = por %p39, %p40
      %p43 = scmp.ne.s32.totalorder %s26, %s42
      %p44 = scmp.eq.s32.totalorder %s18, 0
      %p45 = por %p43, %p44
      %s47 = sadd.s32 %s46, 1
      %p50 = scmp.eq.s32.totalorder %s12, 1
      %p51 = scmp.ne.s32.totalorder %s46, %s48
      %p52 = scmp.eq.s32.totalorder %s12, 0
      %p53 = por %p51, %p52
      %p54 = scmp.ne.s32.totalorder %s46, %s48
      %p55 = scmp.eq.s32.totalorder %s17, 1
      %p56 = por %p54, %p55
      %p57 = scmp.ne.s32.totalorder %s48, %s49
      %p58 = scmp.eq.s32.totalorder %s17, 0
      %p59 = por %p57, %p58
      %p60 = scmp.ne.s32.totalorder %s48, %s49
      %p61 = scmp.eq.s32.totalorder %s18, 1
      %p62 = por %p60, %p61
      %p64 = scmp.ne.s32.totalorder %s49, %s63
      %p65 = scmp.eq.s32.totalorder %s18, 0
      %p66 = por %p64, %p65
      %s68 = sadd.s32 %s67, 1
      %p71 = scmp.eq.s32.totalorder %s12, 1
      %p72 = scmp.ne.s32.totalorder %s67, %s69
      %p73 = scmp.eq.s32.totalorder %s12, 0
      %p74 = por %p72, %p73
      %p75 = scmp.ne.s32.totalorder %s67, %s69
      %p76 = scmp.eq.s32.totalorder %s17, 1
      %p77 = por %p75, %p76
      %p78 = scmp.ne.s32.totalorder %s69, %s70
      %p79 = scmp.eq.s32.totalorder %s17, 0
      %p80 = por %p78, %p79
      %p81 = scmp.ne.s32.totalorder %s69, %s70
      %p82 = scmp.eq.s32.totalorder %s18, 1
      %p83 = por %p81, %p82
      %p85 = scmp.ne.s32.totalorder %s70, %s84
      %p86 = scmp.eq.s32.totalorder %s18, 0
      %p87 = por %p85, %p86
      %s89 = sadd.s32 %s88, 1
      %p92 = scmp.eq.s32.totalorder %s12, 1
      %p93 = scmp.ne.s32.totalorder %s88, %s90
      %p94 = scmp.eq.s32.totalorder %s12, 0
      %p95 = por %p93, %p94
      %p96 = scmp.ne.s32.totalorder %s88, %s90
      %p97 = scmp.eq.s32.totalorder %s17, 1
      %p98 = por %p96, %p97
      %p99 = scmp.ne.s32.totalorder %s90, %s91
      %p100 = scmp.eq.s32.totalorder %s17, 0
      %p101 = por %p99, %p100
      %p102 = scmp.ne.s32.totalorder %s90, %s91
      %p103 = scmp.eq.s32.totalorder %s18, 1
      %p104 = por %p102, %p103
      %p106 = scmp.ne.s32.totalorder %s91, %s105
      %p107 = scmp.eq.s32.totalorder %s18, 0
      %p108 = por %p106, %p107
      %s110 = sadd.s32 %s109, 1
      %p113 = scmp.eq.s32.totalorder %s12, 1
      %p114 = scmp.ne.s32.totalorder %s109, %s111
      %p115 = scmp.eq.s32.totalorder %s12, 0
      %p116 = por %p114, %p115
      %p117 = scmp.ne.s32.totalorder %s109, %s111
      %p118 = scmp.eq.s32.totalorder %s17, 1
      %p119 = por %p117, %p118
      %p120 = scmp.ne.s32.totalorder %s111, %s112
      %p121 = scmp.eq.s32.totalorder %s17, 0
      %p122 = por %p120, %p121
      %p123 = scmp.ne.s32.totalorder %s111, %s112
      %p124 = scmp.eq.s32.totalorder %s18, 1
      %p125 = por %p123, %p124
      %p127 = scmp.ne.s32.totalorder %s112, %s126
      %p128 = scmp.eq.s32.totalorder %s18, 0
      %p129 = por %p127, %p128
      %s131 = sadd.s32 %s130, 1
      %p134 = scmp.eq.s32.totalorder %s12, 1
      %p135 = scmp.ne.s32.totalorder %s130, %s132
      %p136 = scmp.eq.s32.totalorder %s12, 0
      %p137 = por %p135, %p136
      %p138 = scmp.ne.s32.totalorder %s130, %s132
      %p139 = scmp.eq.s32.totalorder %s17, 1
      %p140 = por %p138, %p139
      %p141 = scmp.ne.s32.totalorder %s132, %s133
      %p142 = scmp.eq.s32.totalorder %s17, 0
      %p143 = por %p141, %p142
      %p144 = scmp.ne.s32.totalorder %s132, %s133
      %p145 = scmp.eq.s32.totalorder %s18, 1
      %p146 = por %p144, %p145
      %p148 = scmp.ne.s32.totalorder %s133, %s147
      %p149 = scmp.eq.s32.totalorder %s18, 0
      %p150 = por %p148, %p149
      %s151 = ssub.s32 %s12, %s19
      %p152 = scmp.eq.s32.totalorder %s151, 0
      %s154 = sadd.s32 %s153, 1
      %s155 = scalar_select %p152, %s153, %s154
      %p158 = pneg %p152
      %p159 = scmp.eq.s32.totalorder %s12, 1
      %p160 = por %p158, %p159
      %p161 = scmp.ne.s32.totalorder %s153, %s156
      %p162 = scmp.eq.s32.totalorder %s12, 0
      %p163 = por %p161, %p162
      %p164 = scmp.ne.s32.totalorder %s153, %s156
      %p165 = scmp.eq.s32.totalorder %s17, 1
      %p166 = por %p164, %p165
      %p167 = scmp.ne.s32.totalorder %s156, %s157
      %p168 = scmp.eq.s32.totalorder %s17, 0
      %p169 = por %p167, %p168
      %p170 = scmp.ne.s32.totalorder %s156, %s157
      %p171 = scmp.eq.s32.totalorder %s18, 1
      %p172 = por %p170, %p171
      %p174 = scmp.ne.s32.totalorder %s157, %s173
      %p175 = scmp.eq.s32.totalorder %s18, 0
      %p176 = por %p174, %p175
      %p177 = scmp.le.s32.totalorder 1, %s12
      %p178 = scmp.lt.s32.totalorder %s12, 3
      %p179 = pnand %p177, %p178
      %p180 = pneg %p179
      // Predicated region
      $region9: #{tpu_custom_call.1} parent=5 // pred_check
        _
      $region10: #{tpu_custom_call.1} parent=5 // pred_check_branch
        %182 = sbr.rel (%p179) target = $region12
      $region11: #{tpu_custom_call.1} parent=5 // pred_region
        %s183 = ssub.s32 %s12, 1
        // Predicated region
        $region13: #{tpu_custom_call.1} parent=11 // pred_check
          %p184 = pneg %p59
        $region14: #{tpu_custom_call.1} parent=11 // pred_check_branch
          %186 = sbr.rel (%p184) target = $region16
        $region15: #{tpu_custom_call.1} parent=11 // pred_region
          _
        $region16: #{tpu_custom_call.1} parent=11 // pred_fallthru
          _
        // Predicated region
        $region17: #{tpu_custom_call.1} parent=11 // pred_check
          %p187 = pneg %p80
        $region18: #{tpu_custom_call.1} parent=11 // pred_check_branch
          %189 = sbr.rel (%p187) target = $region20
        $region19: #{tpu_custom_call.1} parent=11 // pred_region
          _
        $region20: #{tpu_custom_call.1} parent=11 // pred_fallthru
          _
        // Predicated region
        $region21: #{tpu_custom_call.1} parent=11 // pred_check
          %p190 = pneg %p101
        $region22: #{tpu_custom_call.1} parent=11 // pred_check_branch
          %192 = sbr.rel (%p190) target = $region24
        $region23: #{tpu_custom_call.1} parent=11 // pred_region
          _
        $region24: #{tpu_custom_call.1} parent=11 // pred_fallthru
          _
        // Predicated region
        $region25: #{tpu_custom_call.1} parent=11 // pred_check
          %p193 = pneg %p122
        $region26: #{tpu_custom_call.1} parent=11 // pred_check_branch
          %195 = sbr.rel (%p193) target = $region28
        $region27: #{tpu_custom_call.1} parent=11 // pred_region
          _
        $region28: #{tpu_custom_call.1} parent=11 // pred_fallthru
          _
        // Predicated region
        $region29: #{tpu_custom_call.1} parent=11 // pred_check
          %p196 = pneg %p143
        $region30: #{tpu_custom_call.1} parent=11 // pred_check_branch
          %198 = sbr.rel (%p196) target = $region32
        $region31: #{tpu_custom_call.1} parent=11 // pred_region
          _
        $region32: #{tpu_custom_call.1} parent=11 // pred_fallthru
          _
      $region12: #{tpu_custom_call.1} parent=5 // pred_fallthru
        _
      %p199 = scmp.lt.s32.totalorder %s12, 2
      // Predicated region
      $region33: #{tpu_custom_call.1} parent=5 // pred_check
        %p200 = pneg %p199
      $region34: #{tpu_custom_call.1} parent=5 // pred_check_branch
        %202 = sbr.rel (%p200) target = $region36
      $region35: #{tpu_custom_call.1} parent=5 // pred_region
        // Predicated region
        $region37: #{tpu_custom_call.1} parent=35 // pred_check
          %p203 = pneg %p32
        $region38: #{tpu_custom_call.1} parent=35 // pred_check_branch
          %205 = sbr.rel (%p203) target = $region40
        $region39: #{tpu_custom_call.1} parent=35 // pred_region
          %s206 = smul.u32 8, %s12
          %p207 = scmp.lt.s32.totalorder %s206, 15
          %s208 = scalar_select %p207, %s206, 15
          %s209 = smul.addr %s208, 8
          %s210 = scalar_lea.vmem %s0, %s209
          %s211 = smul.u32 8, %s12
        $region40: #{tpu_custom_call.1} parent=35 // pred_fallthru
          _
      $region36: #{tpu_custom_call.1} parent=5 // pred_fallthru
        _
      %p212 = scmp.le.s32.totalorder 1, %s12
      %p213 = scmp.lt.s32.totalorder %s12, 3
      %p214 = pnand %p212, %p213
      %p215 = pneg %p214
      // Predicated region
      $region41: #{tpu_custom_call.1} parent=5 // pred_check
        _
      $region42: #{tpu_custom_call.1} parent=5 // pred_check_branch
        %217 = sbr.rel (%p214) target = $region44
      $region43: #{tpu_custom_call.1} parent=5 // pred_region
        %s218 = ssub.s32 %s12, 1
        %s219 = smul.u32 8, %s17
        %p220 = scmp.lt.s32.totalorder %s219, 15
        %s221 = scalar_select %p220, %s219, 15
        %s222 = smul.addr %s221, 8
        %s223 = scalar_lea.vmem %s0, %s222
        %p224 = pneg %p38
        %p225 = pneg %p35
        %p226 = pneg %p59
        %p227 = pneg %p56
        %p228 = pneg %p80
        %p229 = pneg %p77
        %p230 = pneg %p101
        %p231 = pneg %p98
        %p232 = pneg %p122
        %p233 = pneg %p119
        %p234 = pneg %p143
        %p235 = pneg %p140
        %p236 = pneg %p169
        %p237 = pneg %p166
        %s238 = sand.u32 %s156, 1
        %s239 = sand.u32 %s156, 1
        %s240 = smul.addr %s239, 128
        %s241 = scalar_lea.vmem [#allocation2], %s240
        %s242 = smul.u32 8, %s17
        %p243 = scmp.lt.s32.totalorder %s242, 15
        %s244 = scalar_select %p243, %s242, 15
        %s245 = smul.addr %s244, 8
        %s246 = scalar_lea.vmem %s0, %s245
        %s247 = smul.u32 8, %s17
        %s248 = smul.u32 8, %s17
        %v249 = vld [vmem:[%s246] sm:$0xff]
        %v250 = vld [vmem:[%s246 + $0x8] sm:$0xff]
        %v251 = vld [vmem:[%s246 + $0x10] sm:$0xff]
        %v252 = vld [vmem:[%s246 + $0x18] sm:$0xff]
        %v253 = vld [vmem:[%s246 + $0x20] sm:$0xff]
        %v254 = vld [vmem:[%s246 + $0x28] sm:$0xff]
        %v255 = vld [vmem:[%s246 + $0x30] sm:$0xff]
        %v256 = vld [vmem:[%s246 + $0x38] sm:$0xff]
        %v257 = vld [vmem:[%s1] sm:$0xff]
        %v258 = vld [vmem:[%s1 + $0x8] sm:$0xff]
        %v259 = vld [vmem:[%s1 + $0x10] sm:$0xff]
        %v260 = vld [vmem:[%s1 + $0x18] sm:$0xff]
        %v261 = vld [vmem:[%s2] sm:$0x1]
        %v263 = vlaneseq
        %v264 = vshrl.u32 %v263, 7
        %v265 = vsub.s32 0, %v264
        %v266 = vrot.slane %v261, %v265
        %vm268 = vcmask 261120
        %v270 = vsel %vm268, %v249, 0
        %v273 = vsel %vm268, %v250, 0
        %v276 = vsel %vm268, %v251, 0
        %v279 = vsel %vm268, %v252, 0
        %v282 = vsel %vm268, %v253, 0
        %v285 = vsel %vm268, %v254, 0
        %v288 = vsel %vm268, %v255, 0
        %v291 = vsel %vm268, %v256, 0
        %293 = vmatprep.subr.mxu0 0.0
        %294 = vmatpush1.msra.mxu0 0.0
        %295 = vmatprep.subr.mxu0 0.0
        %296 = vmatpush1.msra.mxu0 0.0
        %297 = vmatprep.subr.mxu0 0.0
        %298 = vmatpush1.msra.mxu0 0.0
        %299 = vmatprep.subr.mxu0 0.0
        %300 = vmatpush1.msra.mxu0 0.0
        %301 = vmatprep.subr.mxu0 0.0
        %302 = vmatpush1.msra.mxu0 0.0
        %303 = vmatprep.subr.mxu0 0.0
        %304 = vmatpush1.msra.mxu0 0.0
        %305 = vmatprep.subr.mxu0 0.0
        %306 = vmatpush1.msra.mxu0 0.0
        %307 = vmatprep.subr.mxu0 0.0
        %308 = vmatpush1.msra.mxu0 0.0
        %309 = vmatprep.subr.mxu0 0.0
        %310 = vmatpush1.msra.mxu0 0.0
        %311 = vmatprep.subr.mxu0 0.0
        %312 = vmatpush1.msra.mxu0 0.0
        %313 = vmatprep.subr.mxu0 0.0
        %314 = vmatpush1.msra.mxu0 0.0
        %315 = vmatprep.subr.mxu0 0.0
        %316 = vmatpush1.msra.mxu0 0.0
        %317 = vmatprep.subr.mxu0 0.0
        %318 = vmatpush1.msra.mxu0 %v260
        %319 = vmatprep.subr.mxu0 0.0
        %320 = vmatpush1.msra.mxu0 %v259
        %321 = vmatprep.subr.mxu0 0.0
        %322 = vmatpush1.msra.mxu0 %v258
        %323 = vmatprep.subr.mxu0 0.0
        %324 = vmatpush1.msra.mxu0 %v257
        %325 = vmatprep.subr.mxu0 0.0
        %326 = vmatpush2.msra.mxu0 0.0
        %327 = vmatprep.subr.mxu0 0.0
        %328 = vmatpush2.msra.mxu0 0.0
        %329 = vmatprep.subr.mxu0 0.0
        %330 = vmatpush2.msra.mxu0 0.0
        %331 = vmatprep.subr.mxu0 0.0
        %332 = vmatpush2.msra.mxu0 0.0
        %333 = vmatprep.subr.mxu0 0.0
        %334 = vmatpush2.msra.mxu0 0.0
        %335 = vmatprep.subr.mxu0 0.0
        %336 = vmatpush2.msra.mxu0 0.0
        %337 = vmatprep.subr.mxu0 0.0
        %338 = vmatpush2.msra.mxu0 0.0
        %339 = vmatprep.subr.mxu0 0.0
        %340 = vmatpush2.msra.mxu0 0.0
        %341 = vmatprep.subr.mxu0 0.0
        %342 = vmatpush2.msra.mxu0 0.0
        %343 = vmatprep.subr.mxu0 0.0
        %344 = vmatpush2.msra.mxu0 0.0
        %345 = vmatprep.subr.mxu0 0.0
        %346 = vmatpush2.msra.mxu0 0.0
        %347 = vmatprep.subr.mxu0 0.0
        %348 = vmatpush2.msra.mxu0 0.0
        %349 = vmatprep.subr.mxu0 0.0
        %350 = vmatpush2.msra.mxu0 0.0
        %351 = vmatprep.subr.mxu0 0.0
        %352 = vmatpush2.msra.mxu0 0.0
        %353 = vmatprep.subr.mxu0 0.0
        %354 = vmatpush2.msra.mxu0 0.0
        %355 = vmatprep.subr.mxu0 0.0
        %356 = vmatpush2.msra.mxu0 0.0
        %357 = vmatprep.mubr.f32.mxu0 0.0
        %358 = vmatmul.mubr.f32.gmra.mxu0 %v270
        %v359 = vpop.f32.mrf.mxu0
        %v360 = vadd.f32 %v266, %v359
        %v361 = vpop.f32.mrf.mxu0
        %362 = vmatprep.mubr.f32.mxu0 0.0
        %363 = vmatmul.mubr.f32.gmra.mxu0 %v273
        %v364 = vpop.f32.mrf.mxu0
        %v365 = vadd.f32 %v266, %v364
        %v366 = vpop.f32.mrf.mxu0
        %367 = vmatprep.mubr.f32.mxu0 0.0
        %368 = vmatmul.mubr.f32.gmra.mxu0 %v276
        %v369 = vpop.f32.mrf.mxu0
        %v370 = vadd.f32 %v266, %v369
        %v371 = vpop.f32.mrf.mxu0
        %372 = vmatprep.mubr.f32.mxu0 0.0
        %373 = vmatmul.mubr.f32.gmra.mxu0 %v279
        %v374 = vpop.f32.mrf.mxu0
        %v375 = vadd.f32 %v266, %v374
        %v376 = vpop.f32.mrf.mxu0
        %377 = vmatprep.mubr.f32.mxu0 0.0
        %378 = vmatmul.mubr.f32.gmra.mxu0 %v282
        %v379 = vpop.f32.mrf.mxu0
        %v380 = vadd.f32 %v266, %v379
        %v381 = vpop.f32.mrf.mxu0
        %382 = vmatprep.mubr.f32.mxu0 0.0
        %383 = vmatmul.mubr.f32.gmra.mxu0 %v285
        %v384 = vpop.f32.mrf.mxu0
        %v385 = vadd.f32 %v266, %v384
        %v386 = vpop.f32.mrf.mxu0
        %387 = vmatprep.mubr.f32.mxu0 0.0
        %388 = vmatmul.mubr.f32.gmra.mxu0 %v288
        %v389 = vpop.f32.mrf.mxu0
        %v390 = vadd.f32 %v266, %v389
        %v391 = vpop.f32.mrf.mxu0
        %392 = vmatprep.mubr.f32.mxu0 0.0
        %393 = vmatmul.mubr.f32.gmra.mxu0 %v291
        %v394 = vpop.f32.mrf.mxu0
        %v395 = vadd.f32 %v266, %v394
        %v396 = vpop.f32.mrf.mxu0
        %397 = vdwg.mxu0
        %v398 = vmax.f32 %v360, 0.0
        %v399 = vmax.f32 %v365, 0.0
        %v400 = vmax.f32 %v370, 0.0
        %v401 = vmax.f32 %v375, 0.0
        %v402 = vmax.f32 %v380, 0.0
        %v403 = vmax.f32 %v385, 0.0
        %v404 = vmax.f32 %v390, 0.0
        %v405 = vmax.f32 %v395, 0.0
        %v406 = vld [vmem:[%s3] sm:$0xff]
        %v407 = vld [vmem:[%s3 + $0x8] sm:$0xff]
        %v408 = vld [vmem:[%s3 + $0x10] sm:$0xff]
        %v409 = vld [vmem:[%s3 + $0x18] sm:$0xff]
        %v411 = vsel %vm268, %v398, 0
        %v414 = vsel %vm268, %v399, 0
        %v417 = vsel %vm268, %v400, 0
        %v420 = vsel %vm268, %v401, 0
        %v423 = vsel %vm268, %v402, 0
        %v426 = vsel %vm268, %v403, 0
        %v429 = vsel %vm268, %v404, 0
        %v432 = vsel %vm268, %v405, 0
        %434 = vmatprep.subr.mxu0 0.0
        %435 = vmatpush1.msra.mxu0 0.0
        %436 = vmatprep.subr.mxu0 0.0
        %437 = vmatpush1.msra.mxu0 0.0
        %438 = vmatprep.subr.mxu0 0.0
        %439 = vmatpush1.msra.mxu0 0.0
        %440 = vmatprep.subr.mxu0 0.0
        %441 = vmatpush1.msra.mxu0 0.0
        %442 = vmatprep.subr.mxu0 0.0
        %443 = vmatpush1.msra.mxu0 0.0
        %444 = vmatprep.subr.mxu0 0.0
        %445 = vmatpush1.msra.mxu0 0.0
        %446 = vmatprep.subr.mxu0 0.0
        %447 = vmatpush1.msra.mxu0 0.0
        %448 = vmatprep.subr.mxu0 0.0
        %449 = vmatpush1.msra.mxu0 0.0
        %450 = vmatprep.subr.mxu0 0.0
        %451 = vmatpush1.msra.mxu0 0.0
        %452 = vmatprep.subr.mxu0 0.0
        %453 = vmatpush1.msra.mxu0 0.0
        %454 = vmatprep.subr.mxu0 0.0
        %455 = vmatpush1.msra.mxu0 0.0
        %456 = vmatprep.subr.mxu0 0.0
        %457 = vmatpush1.msra.mxu0 0.0
        %458 = vmatprep.subr.mxu0 0.0
        %459 = vmatpush1.msra.mxu0 %v409
        %460 = vmatprep.subr.mxu0 0.0
        %461 = vmatpush1.msra.mxu0 %v408
        %462 = vmatprep.subr.mxu0 0.0
        %463 = vmatpush1.msra.mxu0 %v407
        %464 = vmatprep.subr.mxu0 0.0
        %465 = vmatpush1.msra.mxu0 %v406
        %466 = vmatprep.subr.mxu0 0.0
        %467 = vmatpush2.msra.mxu0 0.0
        %468 = vmatprep.subr.mxu0 0.0
        %469 = vmatpush2.msra.mxu0 0.0
        %470 = vmatprep.subr.mxu0 0.0
        %471 = vmatpush2.msra.mxu0 0.0
        %472 = vmatprep.subr.mxu0 0.0
        %473 = vmatpush2.msra.mxu0 0.0
        %474 = vmatprep.subr.mxu0 0.0
        %475 = vmatpush2.msra.mxu0 0.0
        %476 = vmatprep.subr.mxu0 0.0
        %477 = vmatpush2.msra.mxu0 0.0
        %478 = vmatprep.subr.mxu0 0.0
        %479 = vmatpush2.msra.mxu0 0.0
        %480 = vmatprep.subr.mxu0 0.0
        %481 = vmatpush2.msra.mxu0 0.0
        %482 = vmatprep.subr.mxu0 0.0
        %483 = vmatpush2.msra.mxu0 0.0
        %484 = vmatprep.subr.mxu0 0.0
        %485 = vmatpush2.msra.mxu0 0.0
        %486 = vmatprep.subr.mxu0 0.0
        %487 = vmatpush2.msra.mxu0 0.0
        %488 = vmatprep.subr.mxu0 0.0
        %489 = vmatpush2.msra.mxu0 0.0
        %490 = vmatprep.subr.mxu0 0.0
        %491 = vmatpush2.msra.mxu0 0.0
        %492 = vmatprep.subr.mxu0 0.0
        %493 = vmatpush2.msra.mxu0 0.0
        %494 = vmatprep.subr.mxu0 0.0
        %495 = vmatpush2.msra.mxu0 0.0
        %496 = vmatprep.subr.mxu0 0.0
        %497 = vmatpush2.msra.mxu0 0.0
        %498 = vmatprep.mubr.f32.mxu0 0.0
        %499 = vmatmul.mubr.f32.gmra.mxu0 %v411
        %v500 = vpop.f32.mrf.mxu0
        %v501 = vadd.f32 0.0, %v500
        %v502 = vpop.f32.mrf.mxu0
        %503 = vmatprep.mubr.f32.mxu0 0.0
        %504 = vmatmul.mubr.f32.gmra.mxu0 %v414
        %v505 = vpop.f32.mrf.mxu0
        %v506 = vadd.f32 0.0, %v505
        %v507 = vpop.f32.mrf.mxu0
        %508 = vmatprep.mubr.f32.mxu0 0.0
        %509 = vmatmul.mubr.f32.gmra.mxu0 %v417
        %v510 = vpop.f32.mrf.mxu0
        %v511 = vadd.f32 0.0, %v510
        %v512 = vpop.f32.mrf.mxu0
        %513 = vmatprep.mubr.f32.mxu0 0.0
        %514 = vmatmul.mubr.f32.gmra.mxu0 %v420
        %v515 = vpop.f32.mrf.mxu0
        %v516 = vadd.f32 0.0, %v515
        %v517 = vpop.f32.mrf.mxu0
        %518 = vmatprep.mubr.f32.mxu0 0.0
        %519 = vmatmul.mubr.f32.gmra.mxu0 %v423
        %v520 = vpop.f32.mrf.mxu0
        %v521 = vadd.f32 0.0, %v520
        %v522 = vpop.f32.mrf.mxu0
        %523 = vmatprep.mubr.f32.mxu0 0.0
        %524 = vmatmul.mubr.f32.gmra.mxu0 %v426
        %v525 = vpop.f32.mrf.mxu0
        %v526 = vadd.f32 0.0, %v525
        %v527 = vpop.f32.mrf.mxu0
        %528 = vmatprep.mubr.f32.mxu0 0.0
        %529 = vmatmul.mubr.f32.gmra.mxu0 %v429
        %v530 = vpop.f32.mrf.mxu0
        %v531 = vadd.f32 0.0, %v530
        %v532 = vpop.f32.mrf.mxu0
        %533 = vmatprep.mubr.f32.mxu0 0.0
        %534 = vmatmul.mubr.f32.gmra.mxu0 %v432
        %v535 = vpop.f32.mrf.mxu0
        %v536 = vadd.f32 0.0, %v535
        %v537 = vpop.f32.mrf.mxu0
        %538 = vdwg.mxu0
        %s539 = scalar_lea.vmem %s3, 32
        %v540 = vld [vmem:[%s539] sm:$0xff]
        %v541 = vld [vmem:[%s539 + $0x8] sm:$0xff]
        %v542 = vld [vmem:[%s539 + $0x10] sm:$0xff]
        %v543 = vld [vmem:[%s539 + $0x18] sm:$0xff]
        %544 = vmatprep.subr.mxu0 0.0
        %545 = vmatpush1.msra.mxu0 0.0
        %546 = vmatprep.subr.mxu0 0.0
        %547 = vmatpush1.msra.mxu0 0.0
        %548 = vmatprep.subr.mxu0 0.0
        %549 = vmatpush1.msra.mxu0 0.0
        %550 = vmatprep.subr.mxu0 0.0
        %551 = vmatpush1.msra.mxu0 0.0
        %552 = vmatprep.subr.mxu0 0.0
        %553 = vmatpush1.msra.mxu0 0.0
        %554 = vmatprep.subr.mxu0 0.0
        %555 = vmatpush1.msra.mxu0 0.0
        %556 = vmatprep.subr.mxu0 0.0
        %557 = vmatpush1.msra.mxu0 0.0
        %558 = vmatprep.subr.mxu0 0.0
        %559 = vmatpush1.msra.mxu0 0.0
        %560 = vmatprep.subr.mxu0 0.0
        %561 = vmatpush1.msra.mxu0 0.0
        %562 = vmatprep.subr.mxu0 0.0
        %563 = vmatpush1.msra.mxu0 0.0
        %564 = vmatprep.subr.mxu0 0.0
        %565 = vmatpush1.msra.mxu0 0.0
        %566 = vmatprep.subr.mxu0 0.0
        %567 = vmatpush1.msra.mxu0 0.0
        %568 = vmatprep.subr.mxu0 0.0
        %569 = vmatpush1.msra.mxu0 %v543
        %570 = vmatprep.subr.mxu0 0.0
        %571 = vmatpush1.msra.mxu0 %v542
        %572 = vmatprep.subr.mxu0 0.0
        %573 = vmatpush1.msra.mxu0 %v541
        %574 = vmatprep.subr.mxu0 0.0
        %575 = vmatpush1.msra.mxu0 %v540
        %576 = vmatprep.subr.mxu0 0.0
        %577 = vmatpush2.msra.mxu0 0.0
        %578 = vmatprep.subr.mxu0 0.0
        %579 = vmatpush2.msra.mxu0 0.0
        %580 = vmatprep.subr.mxu0 0.0
        %581 = vmatpush2.msra.mxu0 0.0
        %582 = vmatprep.subr.mxu0 0.0
        %583 = vmatpush2.msra.mxu0 0.0
        %584 = vmatprep.subr.mxu0 0.0
        %585 = vmatpush2.msra.mxu0 0.0
        %586 = vmatprep.subr.mxu0 0.0
        %587 = vmatpush2.msra.mxu0 0.0
        %588 = vmatprep.subr.mxu0 0.0
        %589 = vmatpush2.msra.mxu0 0.0
        %590 = vmatprep.subr.mxu0 0.0
        %591 = vmatpush2.msra.mxu0 0.0
        %592 = vmatprep.subr.mxu0 0.0
        %593 = vmatpush2.msra.mxu0 0.0
        %594 = vmatprep.subr.mxu0 0.0
        %595 = vmatpush2.msra.mxu0 0.0
        %596 = vmatprep.subr.mxu0 0.0
        %597 = vmatpush2.msra.mxu0 0.0
        %598 = vmatprep.subr.mxu0 0.0
        %599 = vmatpush2.msra.mxu0 0.0
        %600 = vmatprep.subr.mxu0 0.0
        %601 = vmatpush2.msra.mxu0 0.0
        %602 = vmatprep.subr.mxu0 0.0
        %603 = vmatpush2.msra.mxu0 0.0
        %604 = vmatprep.subr.mxu0 0.0
        %605 = vmatpush2.msra.mxu0 0.0
        %606 = vmatprep.subr.mxu0 0.0
        %607 = vmatpush2.msra.mxu0 0.0
        %608 = vmatprep.mubr.f32.mxu0 0.0
        %609 = vmatmul.mubr.f32.gmra.mxu0 %v411
        %v610 = vpop.f32.mrf.mxu0
        %v611 = vadd.f32 0.0, %v610
        %v612 = vpop.f32.mrf.mxu0
        %613 = vmatprep.mubr.f32.mxu0 0.0
        %614 = vmatmul.mubr.f32.gmra.mxu0 %v414
        %v615 = vpop.f32.mrf.mxu0
        %v616 = vadd.f32 0.0, %v615
        %v617 = vpop.f32.mrf.mxu0
        %618 = vmatprep.mubr.f32.mxu0 0.0
        %619 = vmatmul.mubr.f32.gmra.mxu0 %v417
        %v620 = vpop.f32.mrf.mxu0
        %v621 = vadd.f32 0.0, %v620
        %v622 = vpop.f32.mrf.mxu0
        %623 = vmatprep.mubr.f32.mxu0 0.0
        %624 = vmatmul.mubr.f32.gmra.mxu0 %v420
        %v625 = vpop.f32.mrf.mxu0
        %v626 = vadd.f32 0.0, %v625
        %v627 = vpop.f32.mrf.mxu0
        %628 = vmatprep.mubr.f32.mxu0 0.0
        %629 = vmatmul.mubr.f32.gmra.mxu0 %v423
        %v630 = vpop.f32.mrf.mxu0
        %v631 = vadd.f32 0.0, %v630
        %v632 = vpop.f32.mrf.mxu0
        %633 = vmatprep.mubr.f32.mxu0 0.0
        %634 = vmatmul.mubr.f32.gmra.mxu0 %v426
        %v635 = vpop.f32.mrf.mxu0
        %v636 = vadd.f32 0.0, %v635
        %v637 = vpop.f32.mrf.mxu0
        %638 = vmatprep.mubr.f32.mxu0 0.0
        %639 = vmatmul.mubr.f32.gmra.mxu0 %v429
        %v640 = vpop.f32.mrf.mxu0
        %v641 = vadd.f32 0.0, %v640
        %v642 = vpop.f32.mrf.mxu0
        %643 = vmatprep.mubr.f32.mxu0 0.0
        %644 = vmatmul.mubr.f32.gmra.mxu0 %v432
        %v645 = vpop.f32.mrf.mxu0
        %v646 = vadd.f32 0.0, %v645
        %v647 = vpop.f32.mrf.mxu0
        %648 = vdwg.mxu0
        %s649 = scalar_lea.vmem %s3, 64
        %v650 = vld [vmem:[%s649] sm:$0xff]
        %v651 = vld [vmem:[%s649 + $0x8] sm:$0xff]
        %v652 = vld [vmem:[%s649 + $0x10] sm:$0xff]
        %v653 = vld [vmem:[%s649 + $0x18] sm:$0xff]
        %654 = vmatprep.subr.mxu0 0.0
        %655 = vmatpush1.msra.mxu0 0.0
        %656 = vmatprep.subr.mxu0 0.0
        %657 = vmatpush1.msra.mxu0 0.0
        %658 = vmatprep.subr.mxu0 0.0
        %659 = vmatpush1.msra.mxu0 0.0
        %660 = vmatprep.subr.mxu0 0.0
        %661 = vmatpush1.msra.mxu0 0.0
        %662 = vmatprep.subr.mxu0 0.0
        %663 = vmatpush1.msra.mxu0 0.0
        %664 = vmatprep.subr.mxu0 0.0
        %665 = vmatpush1.msra.mxu0 0.0
        %666 = vmatprep.subr.mxu0 0.0
        %667 = vmatpush1.msra.mxu0 0.0
        %668 = vmatprep.subr.mxu0 0.0
        %669 = vmatpush1.msra.mxu0 0.0
        %670 = vmatprep.subr.mxu0 0.0
        %671 = vmatpush1.msra.mxu0 0.0
        %672 = vmatprep.subr.mxu0 0.0
        %673 = vmatpush1.msra.mxu0 0.0
        %674 = vmatprep.subr.mxu0 0.0
        %675 = vmatpush1.msra.mxu0 0.0
        %676 = vmatprep.subr.mxu0 0.0
        %677 = vmatpush1.msra.mxu0 0.0
        %678 = vmatprep.subr.mxu0 0.0
        %679 = vmatpush1.msra.mxu0 %v653
        %680 = vmatprep.subr.mxu0 0.0
        %681 = vmatpush1.msra.mxu0 %v652
        %682 = vmatprep.subr.mxu0 0.0
        %683 = vmatpush1.msra.mxu0 %v651
        %684 = vmatprep.subr.mxu0 0.0
        %685 = vmatpush1.msra.mxu0 %v650
        %686 = vmatprep.subr.mxu0 0.0
        %687 = vmatpush2.msra.mxu0 0.0
        %688 = vmatprep.subr.mxu0 0.0
        %689 = vmatpush2.msra.mxu0 0.0
        %690 = vmatprep.subr.mxu0 0.0
        %691 = vmatpush2.msra.mxu0 0.0
        %692 = vmatprep.subr.mxu0 0.0
        %693 = vmatpush2.msra.mxu0 0.0
        %694 = vmatprep.subr.mxu0 0.0
        %695 = vmatpush2.msra.mxu0 0.0
        %696 = vmatprep.subr.mxu0 0.0
        %697 = vmatpush2.msra.mxu0 0.0
        %698 = vmatprep.subr.mxu0 0.0
        %699 = vmatpush2.msra.mxu0 0.0
        %700 = vmatprep.subr.mxu0 0.0
        %701 = vmatpush2.msra.mxu0 0.0
        %702 = vmatprep.subr.mxu0 0.0
        %703 = vmatpush2.msra.mxu0 0.0
        %704 = vmatprep.subr.mxu0 0.0
        %705 = vmatpush2.msra.mxu0 0.0
        %706 = vmatprep.subr.mxu0 0.0
        %707 = vmatpush2.msra.mxu0 0.0
        %708 = vmatprep.subr.mxu0 0.0
        %709 = vmatpush2.msra.mxu0 0.0
        %710 = vmatprep.subr.mxu0 0.0
        %711 = vmatpush2.msra.mxu0 0.0
        %712 = vmatprep.subr.mxu0 0.0
        %713 = vmatpush2.msra.mxu0 0.0
        %714 = vmatprep.subr.mxu0 0.0
        %715 = vmatpush2.msra.mxu0 0.0
        %716 = vmatprep.subr.mxu0 0.0
        %717 = vmatpush2.msra.mxu0 0.0
        %718 = vmatprep.mubr.f32.mxu0 0.0
        %719 = vmatmul.mubr.f32.gmra.mxu0 %v411
        %v720 = vpop.f32.mrf.mxu0
        %v721 = vadd.f32 0.0, %v720
        %v722 = vpop.f32.mrf.mxu0
        %723 = vmatprep.mubr.f32.mxu0 0.0
        %724 = vmatmul.mubr.f32.gmra.mxu0 %v414
        %v725 = vpop.f32.mrf.mxu0
        %v726 = vadd.f32 0.0, %v725
        %v727 = vpop.f32.mrf.mxu0
        %728 = vmatprep.mubr.f32.mxu0 0.0
        %729 = vmatmul.mubr.f32.gmra.mxu0 %v417
        %v730 = vpop.f32.mrf.mxu0
        %v731 = vadd.f32 0.0, %v730
        %v732 = vpop.f32.mrf.mxu0
        %733 = vmatprep.mubr.f32.mxu0 0.0
        %734 = vmatmul.mubr.f32.gmra.mxu0 %v420
        %v735 = vpop.f32.mrf.mxu0
        %v736 = vadd.f32 0.0, %v735
        %v737 = vpop.f32.mrf.mxu0
        %738 = vmatprep.mubr.f32.mxu0 0.0
        %739 = vmatmul.mubr.f32.gmra.mxu0 %v423
        %v740 = vpop.f32.mrf.mxu0
        %v741 = vadd.f32 0.0, %v740
        %v742 = vpop.f32.mrf.mxu0
        %743 = vmatprep.mubr.f32.mxu0 0.0
        %744 = vmatmul.mubr.f32.gmra.mxu0 %v426
        %v745 = vpop.f32.mrf.mxu0
        %v746 = vadd.f32 0.0, %v745
        %v747 = vpop.f32.mrf.mxu0
        %748 = vmatprep.mubr.f32.mxu0 0.0
        %749 = vmatmul.mubr.f32.gmra.mxu0 %v429
        %v750 = vpop.f32.mrf.mxu0
        %v751 = vadd.f32 0.0, %v750
        %v752 = vpop.f32.mrf.mxu0
        %753 = vmatprep.mubr.f32.mxu0 0.0
        %754 = vmatmul.mubr.f32.gmra.mxu0 %v432
        %v755 = vpop.f32.mrf.mxu0
        %v756 = vadd.f32 0.0, %v755
        %v757 = vpop.f32.mrf.mxu0
        %758 = vdwg.mxu0
        %s759 = scalar_lea.vmem %s3, 96
        %v760 = vld [vmem:[%s759] sm:$0xff]
        %v761 = vld [vmem:[%s759 + $0x8] sm:$0xff]
        %v762 = vld [vmem:[%s759 + $0x10] sm:$0xff]
        %v763 = vld [vmem:[%s759 + $0x18] sm:$0xff]
        %764 = vmatprep.subr.mxu0 0.0
        %765 = vmatpush1.msra.mxu0 0.0
        %766 = vmatprep.subr.mxu0 0.0
        %767 = vmatpush1.msra.mxu0 0.0
        %768 = vmatprep.subr.mxu0 0.0
        %769 = vmatpush1.msra.mxu0 0.0
        %770 = vmatprep.subr.mxu0 0.0
        %771 = vmatpush1.msra.mxu0 0.0
        %772 = vmatprep.subr.mxu0 0.0
        %773 = vmatpush1.msra.mxu0 0.0
        %774 = vmatprep.subr.mxu0 0.0
        %775 = vmatpush1.msra.mxu0 0.0
        %776 = vmatprep.subr.mxu0 0.0
        %777 = vmatpush1.msra.mxu0 0.0
        %778 = vmatprep.subr.mxu0 0.0
        %779 = vmatpush1.msra.mxu0 0.0
        %780 = vmatprep.subr.mxu0 0.0
        %781 = vmatpush1.msra.mxu0 0.0
        %782 = vmatprep.subr.mxu0 0.0
        %783 = vmatpush1.msra.mxu0 0.0
        %784 = vmatprep.subr.mxu0 0.0
        %785 = vmatpush1.msra.mxu0 0.0
        %786 = vmatprep.subr.mxu0 0.0
        %787 = vmatpush1.msra.mxu0 0.0
        %788 = vmatprep.subr.mxu0 0.0
        %789 = vmatpush1.msra.mxu0 %v763
        %790 = vmatprep.subr.mxu0 0.0
        %791 = vmatpush1.msra.mxu0 %v762
        %792 = vmatprep.subr.mxu0 0.0
        %793 = vmatpush1.msra.mxu0 %v761
        %794 = vmatprep.subr.mxu0 0.0
        %795 = vmatpush1.msra.mxu0 %v760
        %796 = vmatprep.subr.mxu0 0.0
        %797 = vmatpush2.msra.mxu0 0.0
        %798 = vmatprep.subr.mxu0 0.0
        %799 = vmatpush2.msra.mxu0 0.0
        %800 = vmatprep.subr.mxu0 0.0
        %801 = vmatpush2.msra.mxu0 0.0
        %802 = vmatprep.subr.mxu0 0.0
        %803 = vmatpush2.msra.mxu0 0.0
        %804 = vmatprep.subr.mxu0 0.0
        %805 = vmatpush2.msra.mxu0 0.0
        %806 = vmatprep.subr.mxu0 0.0
        %807 = vmatpush2.msra.mxu0 0.0
        %808 = vmatprep.subr.mxu0 0.0
        %809 = vmatpush2.msra.mxu0 0.0
        %810 = vmatprep.subr.mxu0 0.0
        %811 = vmatpush2.msra.mxu0 0.0
        %812 = vmatprep.subr.mxu0 0.0
        %813 = vmatpush2.msra.mxu0 0.0
        %814 = vmatprep.subr.mxu0 0.0
        %815 = vmatpush2.msra.mxu0 0.0
        %816 = vmatprep.subr.mxu0 0.0
        %817 = vmatpush2.msra.mxu0 0.0
        %818 = vmatprep.subr.mxu0 0.0
        %819 = vmatpush2.msra.mxu0 0.0
        %820 = vmatprep.subr.mxu0 0.0
        %821 = vmatpush2.msra.mxu0 0.0
        %822 = vmatprep.subr.mxu0 0.0
        %823 = vmatpush2.msra.mxu0 0.0
        %824 = vmatprep.subr.mxu0 0.0
        %825 = vmatpush2.msra.mxu0 0.0
        %826 = vmatprep.subr.mxu0 0.0
        %827 = vmatpush2.msra.mxu0 0.0
        %828 = vmatprep.mubr.f32.mxu0 0.0
        %829 = vmatmul.mubr.f32.gmra.mxu0 %v411
        %v830 = vpop.f32.mrf.mxu0
        %v831 = vadd.f32 0.0, %v830
        %v832 = vpop.f32.mrf.mxu0
        %833 = vmatprep.mubr.f32.mxu0 0.0
        %834 = vmatmul.mubr.f32.gmra.mxu0 %v414
        %v835 = vpop.f32.mrf.mxu0
        %v836 = vadd.f32 0.0, %v835
        %v837 = vpop.f32.mrf.mxu0
        %838 = vmatprep.mubr.f32.mxu0 0.0
        %839 = vmatmul.mubr.f32.gmra.mxu0 %v417
        %v840 = vpop.f32.mrf.mxu0
        %v841 = vadd.f32 0.0, %v840
        %v842 = vpop.f32.mrf.mxu0
        %843 = vmatprep.mubr.f32.mxu0 0.0
        %844 = vmatmul.mubr.f32.gmra.mxu0 %v420
        %v845 = vpop.f32.mrf.mxu0
        %v846 = vadd.f32 0.0, %v845
        %v847 = vpop.f32.mrf.mxu0
        %848 = vmatprep.mubr.f32.mxu0 0.0
        %849 = vmatmul.mubr.f32.gmra.mxu0 %v423
        %v850 = vpop.f32.mrf.mxu0
        %v851 = vadd.f32 0.0, %v850
        %v852 = vpop.f32.mrf.mxu0
        %853 = vmatprep.mubr.f32.mxu0 0.0
        %854 = vmatmul.mubr.f32.gmra.mxu0 %v426
        %v855 = vpop.f32.mrf.mxu0
        %v856 = vadd.f32 0.0, %v855
        %v857 = vpop.f32.mrf.mxu0
        %858 = vmatprep.mubr.f32.mxu0 0.0
        %859 = vmatmul.mubr.f32.gmra.mxu0 %v429
        %v860 = vpop.f32.mrf.mxu0
        %v861 = vadd.f32 0.0, %v860
        %v862 = vpop.f32.mrf.mxu0
        %863 = vmatprep.mubr.f32.mxu0 0.0
        %864 = vmatmul.mubr.f32.gmra.mxu0 %v432
        %v865 = vpop.f32.mrf.mxu0
        %v866 = vadd.f32 0.0, %v865
        %v867 = vpop.f32.mrf.mxu0
        %868 = vdwg.mxu0
        %v869 = vsel %vm268, %v501, 0.0
        %870 = vadd.xlane.f32.xlu0 %v869
        %v871 = vpop.xlane.xlu0 %870
        %v872 = vsel %vm268, %v506, 0.0
        %873 = vadd.xlane.f32.xlu0 %v872
        %v874 = vpop.xlane.xlu0 %873
        %v875 = vsel %vm268, %v511, 0.0
        %876 = vadd.xlane.f32.xlu0 %v875
        %v877 = vpop.xlane.xlu0 %876
        %v878 = vsel %vm268, %v516, 0.0
        %879 = vadd.xlane.f32.xlu0 %v878
        %v880 = vpop.xlane.xlu0 %879
        %v881 = vsel %vm268, %v521, 0.0
        %882 = vadd.xlane.f32.xlu0 %v881
        %v883 = vpop.xlane.xlu0 %882
        %v884 = vsel %vm268, %v526, 0.0
        %885 = vadd.xlane.f32.xlu0 %v884
        %v886 = vpop.xlane.xlu0 %885
        %v887 = vsel %vm268, %v531, 0.0
        %888 = vadd.xlane.f32.xlu0 %v887
        %v889 = vpop.xlane.xlu0 %888
        %v890 = vsel %vm268, %v536, 0.0
        %891 = vadd.xlane.f32.xlu0 %v890
        %v892 = vpop.xlane.xlu0 %891
        %v893 = vadd.f32 %v871, 0.0
        %v894 = vadd.f32 %v874, 0.0
        %v895 = vadd.f32 %v877, 0.0
        %v896 = vadd.f32 %v880, 0.0
        %v897 = vadd.f32 %v883, 0.0
        %v898 = vadd.f32 %v886, 0.0
        %v899 = vadd.f32 %v889, 0.0
        %v900 = vadd.f32 %v892, 0.0
        %v901 = vsel %vm268, %v611, 0.0
        %902 = vadd.xlane.f32.xlu0 %v901
        %v903 = vpop.xlane.xlu0 %902
        %v904 = vsel %vm268, %v616, 0.0
        %905 = vadd.xlane.f32.xlu0 %v904
        %v906 = vpop.xlane.xlu0 %905
        %v907 = vsel %vm268, %v621, 0.0
        %908 = vadd.xlane.f32.xlu0 %v907
        %v909 = vpop.xlane.xlu0 %908
        %v910 = vsel %vm268, %v626, 0.0
        %911 = vadd.xlane.f32.xlu0 %v910
        %v912 = vpop.xlane.xlu0 %911
        %v913 = vsel %vm268, %v631, 0.0
        %914 = vadd.xlane.f32.xlu0 %v913
        %v915 = vpop.xlane.xlu0 %914
        %v916 = vsel %vm268, %v636, 0.0
        %917 = vadd.xlane.f32.xlu0 %v916
        %v918 = vpop.xlane.xlu0 %917
        %v919 = vsel %vm268, %v641, 0.0
        %920 = vadd.xlane.f32.xlu0 %v919
        %v921 = vpop.xlane.xlu0 %920
        %v922 = vsel %vm268, %v646, 0.0
        %923 = vadd.xlane.f32.xlu0 %v922
        %v924 = vpop.xlane.xlu0 %923
        %v925 = vadd.f32 %v893, %v903
        %v926 = vadd.f32 %v894, %v906
        %v927 = vadd.f32 %v895, %v909
        %v928 = vadd.f32 %v896, %v912
        %v929 = vadd.f32 %v897, %v915
        %v930 = vadd.f32 %v898, %v918
        %v931 = vadd.f32 %v899, %v921
        %v932 = vadd.f32 %v900, %v924
        %v933 = vsel %vm268, %v721, 0.0
        %934 = vadd.xlane.f32.xlu0 %v933
        %v935 = vpop.xlane.xlu0 %934
        %v936 = vsel %vm268, %v726, 0.0
        %937 = vadd.xlane.f32.xlu0 %v936
        %v938 = vpop.xlane.xlu0 %937
        %v939 = vsel %vm268, %v731, 0.0
        %940 = vadd.xlane.f32.xlu0 %v939
        %v941 = vpop.xlane.xlu0 %940
        %v942 = vsel %vm268, %v736, 0.0
        %943 = vadd.xlane.f32.xlu0 %v942
        %v944 = vpop.xlane.xlu0 %943
        %v945 = vsel %vm268, %v741, 0.0
        %946 = vadd.xlane.f32.xlu0 %v945
        %v947 = vpop.xlane.xlu0 %946
        %v948 = vsel %vm268, %v746, 0.0
        %949 = vadd.xlane.f32.xlu0 %v948
        %v950 = vpop.xlane.xlu0 %949
        %v951 = vsel %vm268, %v751, 0.0
        %952 = vadd.xlane.f32.xlu0 %v951
        %v953 = vpop.xlane.xlu0 %952
        %v954 = vsel %vm268, %v756, 0.0
        %955 = vadd.xlane.f32.xlu0 %v954
        %v956 = vpop.xlane.xlu0 %955
        %v957 = vadd.f32 %v925, %v935
        %v958 = vadd.f32 %v926, %v938
        %v959 = vadd.f32 %v927, %v941
        %v960 = vadd.f32 %v928, %v944
        %v961 = vadd.f32 %v929, %v947
        %v962 = vadd.f32 %v930, %v950
        %v963 = vadd.f32 %v931, %v953
        %v964 = vadd.f32 %v932, %v956
        %v965 = vsel %vm268, %v831, 0.0
        %966 = vadd.xlane.f32.xlu0 %v965
        %v967 = vpop.xlane.xlu0 %966
        %v968 = vsel %vm268, %v836, 0.0
        %969 = vadd.xlane.f32.xlu0 %v968
        %v970 = vpop.xlane.xlu0 %969
        %v971 = vsel %vm268, %v841, 0.0
        %972 = vadd.xlane.f32.xlu0 %v971
        %v973 = vpop.xlane.xlu0 %972
        %v974 = vsel %vm268, %v846, 0.0
        %975 = vadd.xlane.f32.xlu0 %v974
        %v976 = vpop.xlane.xlu0 %975
        %v977 = vsel %vm268, %v851, 0.0
        %978 = vadd.xlane.f32.xlu0 %v977
        %v979 = vpop.xlane.xlu0 %978
        %v980 = vsel %vm268, %v856, 0.0
        %981 = vadd.xlane.f32.xlu0 %v980
        %v982 = vpop.xlane.xlu0 %981
        %v983 = vsel %vm268, %v861, 0.0
        %984 = vadd.xlane.f32.xlu0 %v983
        %v985 = vpop.xlane.xlu0 %984
        %v986 = vsel %vm268, %v866, 0.0
        %987 = vadd.xlane.f32.xlu0 %v986
        %v988 = vpop.xlane.xlu0 %987
        %v989 = vadd.f32 %v957, %v967
        %v990 = vadd.f32 %v958, %v970
        %v991 = vadd.f32 %v959, %v973
        %v992 = vadd.f32 %v960, %v976
        %v993 = vadd.f32 %v961, %v979
        %v994 = vadd.f32 %v962, %v982
        %v995 = vadd.f32 %v963, %v985
        %v996 = vadd.f32 %v964, %v988
        %v997 = vrcp.pop 128.0
        %v998 = vmul.f32 %v989, %v997
        %v999 = vmul.f32 %v990, %v997
        %v1000 = vmul.f32 %v991, %v997
        %v1001 = vmul.f32 %v992, %v997
        %v1002 = vmul.f32 %v993, %v997
        %v1003 = vmul.f32 %v994, %v997
        %v1004 = vmul.f32 %v995, %v997
        %v1005 = vmul.f32 %v996, %v997
        %v1006 = vsub.f32 %v501, %v998
        %v1007 = vsub.f32 %v506, %v999
        %v1008 = vsub.f32 %v511, %v1000
        %v1009 = vsub.f32 %v516, %v1001
        %v1010 = vsub.f32 %v521, %v1002
        %v1011 = vsub.f32 %v526, %v1003
        %v1012 = vsub.f32 %v531, %v1004
        %v1013 = vsub.f32 %v536, %v1005
        %v1014 = vmul.f32 %v1006, %v1006
        %v1015 = vmul.f32 %v1007, %v1007
        %v1016 = vmul.f32 %v1008, %v1008
        %v1017 = vmul.f32 %v1009, %v1009
        %v1018 = vmul.f32 %v1010, %v1010
        %v1019 = vmul.f32 %v1011, %v1011
        %v1020 = vmul.f32 %v1012, %v1012
        %v1021 = vmul.f32 %v1013, %v1013
        %v1022 = vsel %vm268, %v1014, 0.0
        %1023 = vadd.xlane.f32.xlu0 %v1022
        %v1024 = vpop.xlane.xlu0 %1023
        %v1025 = vsel %vm268, %v1015, 0.0
        %1026 = vadd.xlane.f32.xlu0 %v1025
        %v1027 = vpop.xlane.xlu0 %1026
        %v1028 = vsel %vm268, %v1016, 0.0
        %1029 = vadd.xlane.f32.xlu0 %v1028
        %v1030 = vpop.xlane.xlu0 %1029
        %v1031 = vsel %vm268, %v1017, 0.0
        %1032 = vadd.xlane.f32.xlu0 %v1031
        %v1033 = vpop.xlane.xlu0 %1032
        %v1034 = vsel %vm268, %v1018, 0.0
        %1035 = vadd.xlane.f32.xlu0 %v1034
        %v1036 = vpop.xlane.xlu0 %1035
        %v1037 = vsel %vm268, %v1019, 0.0
        %1038 = vadd.xlane.f32.xlu0 %v1037
        %v1039 = vpop.xlane.xlu0 %1038
        %v1040 = vsel %vm268, %v1020, 0.0
        %1041 = vadd.xlane.f32.xlu0 %v1040
        %v1042 = vpop.xlane.xlu0 %1041
        %v1043 = vsel %vm268, %v1021, 0.0
        %1044 = vadd.xlane.f32.xlu0 %v1043
        %v1045 = vpop.xlane.xlu0 %1044
        %v1046 = vadd.f32 %v1024, 0.0
        %v1047 = vadd.f32 %v1027, 0.0
        %v1048 = vadd.f32 %v1030, 0.0
        %v1049 = vadd.f32 %v1033, 0.0
        %v1050 = vadd.f32 %v1036, 0.0
        %v1051 = vadd.f32 %v1039, 0.0
        %v1052 = vadd.f32 %v1042, 0.0
        %v1053 = vadd.f32 %v1045, 0.0
        %v1054 = vsub.f32 %v611, %v998
        %v1055 = vsub.f32 %v616, %v999
        %v1056 = vsub.f32 %v621, %v1000
        %v1057 = vsub.f32 %v626, %v1001
        %v1058 = vsub.f32 %v631, %v1002
        %v1059 = vsub.f32 %v636, %v1003
        %v1060 = vsub.f32 %v641, %v1004
        %v1061 = vsub.f32 %v646, %v1005
        %v1062 = vmul.f32 %v1054, %v1054
        %v1063 = vmul.f32 %v1055, %v1055
        %v1064 = vmul.f32 %v1056, %v1056
        %v1065 = vmul.f32 %v1057, %v1057
        %v1066 = vmul.f32 %v1058, %v1058
        %v1067 = vmul.f32 %v1059, %v1059
        %v1068 = vmul.f32 %v1060, %v1060
        %v1069 = vmul.f32 %v1061, %v1061
        %v1070 = vsel %vm268, %v1062, 0.0
        %1071 = vadd.xlane.f32.xlu0 %v1070
        %v1072 = vpop.xlane.xlu0 %1071
        %v1073 = vsel %vm268, %v1063, 0.0
        %1074 = vadd.xlane.f32.xlu0 %v1073
        %v1075 = vpop.xlane.xlu0 %1074
        %v1076 = vsel %vm268, %v1064, 0.0
        %1077 = vadd.xlane.f32.xlu0 %v1076
        %v1078 = vpop.xlane.xlu0 %1077
        %v1079 = vsel %vm268, %v1065, 0.0
        %1080 = vadd.xlane.f32.xlu0 %v1079
        %v1081 = vpop.xlane.xlu0 %1080
        %v1082 = vsel %vm268, %v1066, 0.0
        %1083 = vadd.xlane.f32.xlu0 %v1082
        %v1084 = vpop.xlane.xlu0 %1083
        %v1085 = vsel %vm268, %v1067, 0.0
        %1086 = vadd.xlane.f32.xlu0 %v1085
        %v1087 = vpop.xlane.xlu0 %1086
        %v1088 = vsel %vm268, %v1068, 0.0
        %1089 = vadd.xlane.f32.xlu0 %v1088
        %v1090 = vpop.xlane.xlu0 %1089
        %v1091 = vsel %vm268, %v1069, 0.0
        %1092 = vadd.xlane.f32.xlu0 %v1091
        %v1093 = vpop.xlane.xlu0 %1092
        %v1094 = vadd.f32 %v1046, %v1072
        %v1095 = vadd.f32 %v1047, %v1075
        %v1096 = vadd.f32 %v1048, %v1078
        %v1097 = vadd.f32 %v1049, %v1081
        %v1098 = vadd.f32 %v1050, %v1084
        %v1099 = vadd.f32 %v1051, %v1087
        %v1100 = vadd.f32 %v1052, %v1090
        %v1101 = vadd.f32 %v1053, %v1093
        %v1102 = vsub.f32 %v721, %v998
        %v1103 = vsub.f32 %v726, %v999
        %v1104 = vsub.f32 %v731, %v1000
        %v1105 = vsub.f32 %v736, %v1001
        %v1106 = vsub.f32 %v741, %v1002
        %v1107 = vsub.f32 %v746, %v1003
        %v1108 = vsub.f32 %v751, %v1004
        %v1109 = vsub.f32 %v756, %v1005
        %v1110 = vmul.f32 %v1102, %v1102
        %v1111 = vmul.f32 %v1103, %v1103
        %v1112 = vmul.f32 %v1104, %v1104
        %v1113 = vmul.f32 %v1105, %v1105
        %v1114 = vmul.f32 %v1106, %v1106
        %v1115 = vmul.f32 %v1107, %v1107
        %v1116 = vmul.f32 %v1108, %v1108
        %v1117 = vmul.f32 %v1109, %v1109
        %v1118 = vsel %vm268, %v1110, 0.0
        %1119 = vadd.xlane.f32.xlu0 %v1118
        %v1120 = vpop.xlane.xlu0 %1119
        %v1121 = vsel %vm268, %v1111, 0.0
        %1122 = vadd.xlane.f32.xlu0 %v1121
        %v1123 = vpop.xlane.xlu0 %1122
        %v1124 = vsel %vm268, %v1112, 0.0
        %1125 = vadd.xlane.f32.xlu0 %v1124
        %v1126 = vpop.xlane.xlu0 %1125
        %v1127 = vsel %vm268, %v1113, 0.0
        %1128 = vadd.xlane.f32.xlu0 %v1127
        %v1129 = vpop.xlane.xlu0 %1128
        %v1130 = vsel %vm268, %v1114, 0.0
        %1131 = vadd.xlane.f32.xlu0 %v1130
        %v1132 = vpop.xlane.xlu0 %1131
        %v1133 = vsel %vm268, %v1115, 0.0
        %1134 = vadd.xlane.f32.xlu0 %v1133
        %v1135 = vpop.xlane.xlu0 %1134
        %v1136 = vsel %vm268, %v1116, 0.0
        %1137 = vadd.xlane.f32.xlu0 %v1136
        %v1138 = vpop.xlane.xlu0 %1137
        %v1139 = vsel %vm268, %v1117, 0.0
        %1140 = vadd.xlane.f32.xlu0 %v1139
        %v1141 = vpop.xlane.xlu0 %1140
        %v1142 = vadd.f32 %v1094, %v1120
        %v1143 = vadd.f32 %v1095, %v1123
        %v1144 = vadd.f32 %v1096, %v1126
        %v1145 = vadd.f32 %v1097, %v1129
        %v1146 = vadd.f32 %v1098, %v1132
        %v1147 = vadd.f32 %v1099, %v1135
        %v1148 = vadd.f32 %v1100, %v1138
        %v1149 = vadd.f32 %v1101, %v1141
        %v1150 = vsub.f32 %v831, %v998
        %v1151 = vsub.f32 %v836, %v999
        %v1152 = vsub.f32 %v841, %v1000
        %v1153 = vsub.f32 %v846, %v1001
        %v1154 = vsub.f32 %v851, %v1002
        %v1155 = vsub.f32 %v856, %v1003
        %v1156 = vsub.f32 %v861, %v1004
        %v1157 = vsub.f32 %v866, %v1005
        %v1158 = vmul.f32 %v1150, %v1150
        %v1159 = vmul.f32 %v1151, %v1151
        %v1160 = vmul.f32 %v1152, %v1152
        %v1161 = vmul.f32 %v1153, %v1153
        %v1162 = vmul.f32 %v1154, %v1154
        %v1163 = vmul.f32 %v1155, %v1155
        %v1164 = vmul.f32 %v1156, %v1156
        %v1165 = vmul.f32 %v1157, %v1157
        %v1166 = vsel %vm268, %v1158, 0.0
        %1167 = vadd.xlane.f32.xlu0 %v1166
        %v1168 = vpop.xlane.xlu0 %1167
        %v1169 = vsel %vm268, %v1159, 0.0
        %1170 = vadd.xlane.f32.xlu0 %v1169
        %v1171 = vpop.xlane.xlu0 %1170
        %v1172 = vsel %vm268, %v1160, 0.0
        %1173 = vadd.xlane.f32.xlu0 %v1172
        %v1174 = vpop.xlane.xlu0 %1173
        %v1175 = vsel %vm268, %v1161, 0.0
        %1176 = vadd.xlane.f32.xlu0 %v1175
        %v1177 = vpop.xlane.xlu0 %1176
        %v1178 = vsel %vm268, %v1162, 0.0
        %1179 = vadd.xlane.f32.xlu0 %v1178
        %v1180 = vpop.xlane.xlu0 %1179
        %v1181 = vsel %vm268, %v1163, 0.0
        %1182 = vadd.xlane.f32.xlu0 %v1181
        %v1183 = vpop.xlane.xlu0 %1182
        %v1184 = vsel %vm268, %v1164, 0.0
        %1185 = vadd.xlane.f32.xlu0 %v1184
        %v1186 = vpop.xlane.xlu0 %1185
        %v1187 = vsel %vm268, %v1165, 0.0
        %1188 = vadd.xlane.f32.xlu0 %v1187
        %v1189 = vpop.xlane.xlu0 %1188
        %v1190 = vadd.f32 %v1142, %v1168
        %v1191 = vadd.f32 %v1143, %v1171
        %v1192 = vadd.f32 %v1144, %v1174
        %v1193 = vadd.f32 %v1145, %v1177
        %v1194 = vadd.f32 %v1146, %v1180
        %v1195 = vadd.f32 %v1147, %v1183
        %v1196 = vadd.f32 %v1148, %v1186
        %v1197 = vadd.f32 %v1149, %v1189
        %v1198 = vmul.f32 %v1190, %v997
        %v1199 = vmul.f32 %v1191, %v997
        %v1200 = vmul.f32 %v1192, %v997
        %v1201 = vmul.f32 %v1193, %v997
        %v1202 = vmul.f32 %v1194, %v997
        %v1203 = vmul.f32 %v1195, %v997
        %v1204 = vmul.f32 %v1196, %v997
        %v1205 = vmul.f32 %v1197, %v997
        %v1206 = vadd.f32 %v1198, 1e-05
        %v1207 = vadd.f32 %v1199, 1e-05
        %v1208 = vadd.f32 %v1200, 1e-05
        %v1209 = vadd.f32 %v1201, 1e-05
        %v1210 = vadd.f32 %v1202, 1e-05
        %v1211 = vadd.f32 %v1203, 1e-05
        %v1212 = vadd.f32 %v1204, 1e-05
        %v1213 = vadd.f32 %v1205, 1e-05
        %v1214 = vrsqrt.pop %v1206
        %v1215 = vrsqrt.pop %v1207
        %v1216 = vrsqrt.pop %v1208
        %v1217 = vrsqrt.pop %v1209
        %v1218 = vrsqrt.pop %v1210
        %v1219 = vrsqrt.pop %v1211
        %v1220 = vrsqrt.pop %v1212
        %v1221 = vrsqrt.pop %v1213
        %v1222 = vmul.f32 %v1006, %v1214
        %v1223 = vmul.f32 %v1007, %v1215
        %v1224 = vmul.f32 %v1008, %v1216
        %v1225 = vmul.f32 %v1009, %v1217
        %v1226 = vmul.f32 %v1010, %v1218
        %v1227 = vmul.f32 %v1011, %v1219
        %v1228 = vmul.f32 %v1012, %v1220
        %v1229 = vmul.f32 %v1013, %v1221
        %v1230 = vld [vmem:[%s4] sm:$0x1]
        %v1232 = vlaneseq
        %v1233 = vshrl.u32 %v1232, 7
        %v1234 = vsub.s32 0, %v1233
        %v1235 = vrot.slane %v1230, %v1234
        %v1237 = vmul.f32 %v1222, %v1235
        %v1238 = vmul.f32 %v1223, %v1235
        %v1239 = vmul.f32 %v1224, %v1235
        %v1240 = vmul.f32 %v1225, %v1235
        %v1241 = vmul.f32 %v1226, %v1235
        %v1242 = vmul.f32 %v1227, %v1235
        %v1243 = vmul.f32 %v1228, %v1235
        %v1244 = vmul.f32 %v1229, %v1235
        %v1245 = vld [vmem:[%s5] sm:$0x1]
        %v1247 = vlaneseq
        %v1248 = vshrl.u32 %v1247, 7
        %v1249 = vsub.s32 0, %v1248
        %v1250 = vrot.slane %v1245, %v1249
        %v1252 = vadd.f32 %v1237, %v1250
        %v1253 = vadd.f32 %v1238, %v1250
        %v1254 = vadd.f32 %v1239, %v1250
        %v1255 = vadd.f32 %v1240, %v1250
        %v1256 = vadd.f32 %v1241, %v1250
        %v1257 = vadd.f32 %v1242, %v1250
        %v1258 = vadd.f32 %v1243, %v1250
        %v1259 = vadd.f32 %v1244, %v1250
        %v1260 = vpack.c.bf16 %v1253, %v1252
        %v1261 = vpack.c.bf16 %v1255, %v1254
        %v1262 = vpack.c.bf16 %v1257, %v1256
        %v1263 = vpack.c.bf16 %v1259, %v1258
        %v1268 = vunpack.c.l.b16 %v1260
        %v1269 = vunpack.c.h.b16 %v1260
        %v1270 = vunpack.c.l.b16 %v1261
        %v1271 = vunpack.c.h.b16 %v1261
        %v1272 = vunpack.c.l.b16 %v1262
        %v1273 = vunpack.c.h.b16 %v1262
        %v1274 = vunpack.c.l.b16 %v1263
        %v1275 = vunpack.c.h.b16 %v1263
        %v1276 = vpack.c.b16 %v1268, %v1268
        %v1277 = vpack.c.b16 %v1269, %v1269
        %v1278 = vpack.c.b16 %v1270, %v1270
        %v1279 = vpack.c.b16 %v1271, %v1271
        %v1280 = vpack.c.b16 %v1272, %v1272
        %v1281 = vpack.c.b16 %v1273, %v1273
        %v1282 = vpack.c.b16 %v1274, %v1274
        %v1283 = vpack.c.b16 %v1275, %v1275
        %vm1292 = vcmask 257024
        %1293 = vst.msk [vmem:[%s241] sm:$0xf] %vm1292, %v1276
        %1294 = vst.msk [vmem:[%s241 + $0x4] sm:$0xf] %vm1292, %v1277
        %1295 = vst.msk [vmem:[%s241 + $0x8] sm:$0xf] %vm1292, %v1278
        %1296 = vst.msk [vmem:[%s241 + $0xc] sm:$0xf] %vm1292, %v1279
        %1297 = vst.msk [vmem:[%s241 + $0x10] sm:$0xf] %vm1292, %v1280
        %1298 = vst.msk [vmem:[%s241 + $0x14] sm:$0xf] %vm1292, %v1281
        %1299 = vst.msk [vmem:[%s241 + $0x18] sm:$0xf] %vm1292, %v1282
        %1300 = vst.msk [vmem:[%s241 + $0x1c] sm:$0xf] %vm1292, %v1283
        %v1301 = vmul.f32 %v1054, %v1214
        %v1302 = vmul.f32 %v1055, %v1215
        %v1303 = vmul.f32 %v1056, %v1216
        %v1304 = vmul.f32 %v1057, %v1217
        %v1305 = vmul.f32 %v1058, %v1218
        %v1306 = vmul.f32 %v1059, %v1219
        %v1307 = vmul.f32 %v1060, %v1220
        %v1308 = vmul.f32 %v1061, %v1221
        %s1309 = scalar_lea.vmem %s4, 1
        %v1310 = vld [vmem:[%s1309] sm:$0x1]
        %v1312 = vlaneseq
        %v1313 = vshrl.u32 %v1312, 7
        %v1314 = vsub.s32 0, %v1313
        %v1315 = vrot.slane %v1310, %v1314
        %v1317 = vmul.f32 %v1301, %v1315
        %v1318 = vmul.f32 %v1302, %v1315
        %v1319 = vmul.f32 %v1303, %v1315
        %v1320 = vmul.f32 %v1304, %v1315
        %v1321 = vmul.f32 %v1305, %v1315
        %v1322 = vmul.f32 %v1306, %v1315
        %v1323 = vmul.f32 %v1307, %v1315
        %v1324 = vmul.f32 %v1308, %v1315
        %s1325 = scalar_lea.vmem %s5, 1
        %v1326 = vld [vmem:[%s1325] sm:$0x1]
        %v1328 = vlaneseq
        %v1329 = vshrl.u32 %v1328, 7
        %v1330 = vsub.s32 0, %v1329
        %v1331 = vrot.slane %v1326, %v1330
        %v1333 = vadd.f32 %v1317, %v1331
        %v1334 = vadd.f32 %v1318, %v1331
        %v1335 = vadd.f32 %v1319, %v1331
        %v1336 = vadd.f32 %v1320, %v1331
        %v1337 = vadd.f32 %v1321, %v1331
        %v1338 = vadd.f32 %v1322, %v1331
        %v1339 = vadd.f32 %v1323, %v1331
        %v1340 = vadd.f32 %v1324, %v1331
        %v1341 = vpack.c.bf16 %v1334, %v1333
        %v1342 = vpack.c.bf16 %v1336, %v1335
        %v1343 = vpack.c.bf16 %v1338, %v1337
        %v1344 = vpack.c.bf16 %v1340, %v1339
        %v1349 = vunpack.c.l.b16 %v1341
        %v1350 = vunpack.c.h.b16 %v1341
        %v1351 = vunpack.c.l.b16 %v1342
        %v1352 = vunpack.c.h.b16 %v1342
        %v1353 = vunpack.c.l.b16 %v1343
        %v1354 = vunpack.c.h.b16 %v1343
        %v1355 = vunpack.c.l.b16 %v1344
        %v1356 = vunpack.c.h.b16 %v1344
        %v1357 = vpack.c.b16 %v1349, %v1349
        %v1358 = vpack.c.b16 %v1350, %v1350
        %v1359 = vpack.c.b16 %v1351, %v1351
        %v1360 = vpack.c.b16 %v1352, %v1352
        %v1361 = vpack.c.b16 %v1353, %v1353
        %v1362 = vpack.c.b16 %v1354, %v1354
        %v1363 = vpack.c.b16 %v1355, %v1355
        %v1364 = vpack.c.b16 %v1356, %v1356
        %s1373 = scalar_lea.vmem %s241, 32 [#allocation2]
        %1374 = vst.msk [vmem:[%s1373] sm:$0xf] %vm1292, %v1357
        %1375 = vst.msk [vmem:[%s1373 + $0x4] sm:$0xf] %vm1292, %v1358
        %1376 = vst.msk [vmem:[%s1373 + $0x8] sm:$0xf] %vm1292, %v1359
        %1377 = vst.msk [vmem:[%s1373 + $0xc] sm:$0xf] %vm1292, %v1360
        %1378 = vst.msk [vmem:[%s1373 + $0x10] sm:$0xf] %vm1292, %v1361
        %1379 = vst.msk [vmem:[%s1373 + $0x14] sm:$0xf] %vm1292, %v1362
        %1380 = vst.msk [vmem:[%s1373 + $0x18] sm:$0xf] %vm1292, %v1363
        %1381 = vst.msk [vmem:[%s1373 + $0x1c] sm:$0xf] %vm1292, %v1364
        %v1382 = vmul.f32 %v1102, %v1214
        %v1383 = vmul.f32 %v1103, %v1215
        %v1384 = vmul.f32 %v1104, %v1216
        %v1385 = vmul.f32 %v1105, %v1217
        %v1386 = vmul.f32 %v1106, %v1218
        %v1387 = vmul.f32 %v1107, %v1219
        %v1388 = vmul.f32 %v1108, %v1220
        %v1389 = vmul.f32 %v1109, %v1221
        %s1390 = scalar_lea.vmem %s4, 2
        %v1391 = vld [vmem:[%s1390] sm:$0x1]
        %v1393 = vlaneseq
        %v1394 = vshrl.u32 %v1393, 7
        %v1395 = vsub.s32 0, %v1394
        %v1396 = vrot.slane %v1391, %v1395
        %v1398 = vmul.f32 %v1382, %v1396
        %v1399 = vmul.f32 %v1383, %v1396
        %v1400 = vmul.f32 %v1384, %v1396
        %v1401 = vmul.f32 %v1385, %v1396
        %v1402 = vmul.f32 %v1386, %v1396
        %v1403 = vmul.f32 %v1387, %v1396
        %v1404 = vmul.f32 %v1388, %v1396
        %v1405 = vmul.f32 %v1389, %v1396
        %s1406 = scalar_lea.vmem %s5, 2
        %v1407 = vld [vmem:[%s1406] sm:$0x1]
        %v1409 = vlaneseq
        %v1410 = vshrl.u32 %v1409, 7
        %v1411 = vsub.s32 0, %v1410
        %v1412 = vrot.slane %v1407, %v1411
        %v1414 = vadd.f32 %v1398, %v1412
        %v1415 = vadd.f32 %v1399, %v1412
        %v1416 = vadd.f32 %v1400, %v1412
        %v1417 = vadd.f32 %v1401, %v1412
        %v1418 = vadd.f32 %v1402, %v1412
        %v1419 = vadd.f32 %v1403, %v1412
        %v1420 = vadd.f32 %v1404, %v1412
        %v1421 = vadd.f32 %v1405, %v1412
        %v1422 = vpack.c.bf16 %v1415, %v1414
        %v1423 = vpack.c.bf16 %v1417, %v1416
        %v1424 = vpack.c.bf16 %v1419, %v1418
        %v1425 = vpack.c.bf16 %v1421, %v1420
        %v1430 = vunpack.c.l.b16 %v1422
        %v1431 = vunpack.c.h.b16 %v1422
        %v1432 = vunpack.c.l.b16 %v1423
        %v1433 = vunpack.c.h.b16 %v1423
        %v1434 = vunpack.c.l.b16 %v1424
        %v1435 = vunpack.c.h.b16 %v1424
        %v1436 = vunpack.c.l.b16 %v1425
        %v1437 = vunpack.c.h.b16 %v1425
        %v1438 = vpack.c.b16 %v1430, %v1430
        %v1439 = vpack.c.b16 %v1431, %v1431
        %v1440 = vpack.c.b16 %v1432, %v1432
        %v1441 = vpack.c.b16 %v1433, %v1433
        %v1442 = vpack.c.b16 %v1434, %v1434
        %v1443 = vpack.c.b16 %v1435, %v1435
        %v1444 = vpack.c.b16 %v1436, %v1436
        %v1445 = vpack.c.b16 %v1437, %v1437
        %s1454 = scalar_lea.vmem %s241, 64 [#allocation2]
        %1455 = vst.msk [vmem:[%s1454] sm:$0xf] %vm1292, %v1438
        %1456 = vst.msk [vmem:[%s1454 + $0x4] sm:$0xf] %vm1292, %v1439
        %1457 = vst.msk [vmem:[%s1454 + $0x8] sm:$0xf] %vm1292, %v1440
        %1458 = vst.msk [vmem:[%s1454 + $0xc] sm:$0xf] %vm1292, %v1441
        %1459 = vst.msk [vmem:[%s1454 + $0x10] sm:$0xf] %vm1292, %v1442
        %1460 = vst.msk [vmem:[%s1454 + $0x14] sm:$0xf] %vm1292, %v1443
        %1461 = vst.msk [vmem:[%s1454 + $0x18] sm:$0xf] %vm1292, %v1444
        %1462 = vst.msk [vmem:[%s1454 + $0x1c] sm:$0xf] %vm1292, %v1445
        %v1463 = vmul.f32 %v1150, %v1214
        %v1464 = vmul.f32 %v1151, %v1215
        %v1465 = vmul.f32 %v1152, %v1216
        %v1466 = vmul.f32 %v1153, %v1217
        %v1467 = vmul.f32 %v1154, %v1218
        %v1468 = vmul.f32 %v1155, %v1219
        %v1469 = vmul.f32 %v1156, %v1220
        %v1470 = vmul.f32 %v1157, %v1221
        %s1471 = scalar_lea.vmem %s4, 3
        %v1472 = vld [vmem:[%s1471] sm:$0x1]
        %v1474 = vlaneseq
        %v1475 = vshrl.u32 %v1474, 7
        %v1476 = vsub.s32 0, %v1475
        %v1477 = vrot.slane %v1472, %v1476
        %v1479 = vmul.f32 %v1463, %v1477
        %v1480 = vmul.f32 %v1464, %v1477
        %v1481 = vmul.f32 %v1465, %v1477
        %v1482 = vmul.f32 %v1466, %v1477
        %v1483 = vmul.f32 %v1467, %v1477
        %v1484 = vmul.f32 %v1468, %v1477
        %v1485 = vmul.f32 %v1469, %v1477
        %v1486 = vmul.f32 %v1470, %v1477
        %s1487 = scalar_lea.vmem %s5, 3
        %v1488 = vld [vmem:[%s1487] sm:$0x1]
        %v1490 = vlaneseq
        %v1491 = vshrl.u32 %v1490, 7
        %v1492 = vsub.s32 0, %v1491
        %v1493 = vrot.slane %v1488, %v1492
        %v1495 = vadd.f32 %v1479, %v1493
        %v1496 = vadd.f32 %v1480, %v1493
        %v1497 = vadd.f32 %v1481, %v1493
        %v1498 = vadd.f32 %v1482, %v1493
        %v1499 = vadd.f32 %v1483, %v1493
        %v1500 = vadd.f32 %v1484, %v1493
        %v1501 = vadd.f32 %v1485, %v1493
        %v1502 = vadd.f32 %v1486, %v1493
        %v1503 = vpack.c.bf16 %v1496, %v1495
        %v1504 = vpack.c.bf16 %v1498, %v1497
        %v1505 = vpack.c.bf16 %v1500, %v1499
        %v1506 = vpack.c.bf16 %v1502, %v1501
        %v1511 = vunpack.c.l.b16 %v1503
        %v1512 = vunpack.c.h.b16 %v1503
        %v1513 = vunpack.c.l.b16 %v1504
        %v1514 = vunpack.c.h.b16 %v1504
        %v1515 = vunpack.c.l.b16 %v1505
        %v1516 = vunpack.c.h.b16 %v1505
        %v1517 = vunpack.c.l.b16 %v1506
        %v1518 = vunpack.c.h.b16 %v1506
        %v1519 = vpack.c.b16 %v1511, %v1511
        %v1520 = vpack.c.b16 %v1512, %v1512
        %v1521 = vpack.c.b16 %v1513, %v1513
        %v1522 = vpack.c.b16 %v1514, %v1514
        %v1523 = vpack.c.b16 %v1515, %v1515
        %v1524 = vpack.c.b16 %v1516, %v1516
        %v1525 = vpack.c.b16 %v1517, %v1517
        %v1526 = vpack.c.b16 %v1518, %v1518
        %s1535 = scalar_lea.vmem %s241, 96 [#allocation2]
        %1536 = vst.msk [vmem:[%s1535] sm:$0xf] %vm1292, %v1519
        %1537 = vst.msk [vmem:[%s1535 + $0x4] sm:$0xf] %vm1292, %v1520
        %1538 = vst.msk [vmem:[%s1535 + $0x8] sm:$0xf] %vm1292, %v1521
        %1539 = vst.msk [vmem:[%s1535 + $0xc] sm:$0xf] %vm1292, %v1522
        %1540 = vst.msk [vmem:[%s1535 + $0x10] sm:$0xf] %vm1292, %v1523
        %1541 = vst.msk [vmem:[%s1535 + $0x14] sm:$0xf] %vm1292, %v1524
        %1542 = vst.msk [vmem:[%s1535 + $0x18] sm:$0xf] %vm1292, %v1525
        %1543 = vst.msk [vmem:[%s1535 + $0x1c] sm:$0xf] %vm1292, %v1526
        %s1544 = sand.u32 %s156, 1
        %s1545 = sand.u32 %s156, 1
        %s1546 = smul.addr %s1545, 128
        %s1547 = scalar_lea.vmem [#allocation2], %s1546
        // Predicated region
        $region45: #{tpu_custom_call.1} parent=43 // pred_check
          %p1548 = pneg %p166
        $region46: #{tpu_custom_call.1} parent=43 // pred_check_branch
          %1550 = sbr.rel (%p1548) target = $region48
        $region47: #{tpu_custom_call.1} parent=43 // pred_region
          %s1551 = smul.u32 8, %s17
          %s1552 = smul.addr %s1551, 4
          %s1553 = scalar_lea.vmem %s6, %s1552
          // Predicated region
          $region49: #{tpu_custom_call.1} parent=47 // pred_check
            _
          $region50: #{tpu_custom_call.1} parent=47 // pred_check_branch
            %1555 = sbr.rel (0) target = $region52
          $region51: #{tpu_custom_call.1} parent=47 // pred_region
            // Predicated region
            $region53: #{tpu_custom_call.1} parent=51 // pred_check
              _
            $region54: #{tpu_custom_call.1} parent=51 // pred_check_branch
              %1557 = sbr.rel target = $region56
            $region55: #{tpu_custom_call.1} parent=51 // pred_region
              // Predicated region
              $region68: #{tpu_custom_call.1} parent=55 // pred_check
                _
              $region69: #{tpu_custom_call.1} parent=55 // pred_check_branch
                %1635 = sbr.rel (0) target = $region71
              $region70: #{tpu_custom_call.1} parent=55 // pred_region
                loop: start=0, step=1, limit=1
                $region72: #{tpu_custom_call.1} parent=70 // loop_pre_header
                  _
                $region73: #{tpu_custom_call.1} parent=70 // loop_header
                  %s1637 = sphi 0, %s1641
                  %p1638 = scmp.ge.s32.totalorder %s1637, 1
                  %s1642 = sphi %s1547, %s1547
                  %s1643 = sphi %s1553, %s1553
                $region74: #{tpu_custom_call.1} parent=70 // loop_header_branch
                  %1640 = sbr.rel (%p1638) target = $region78
                $region75: #{tpu_custom_call.1} parent=70 // loop_body
                  _
                $region76: #{tpu_custom_call.1} parent=70 // loop_footer
                  %s1641 = sadd.s32 1, %s1637
                $region77: #{tpu_custom_call.1} parent=70 // loop_footer_branch
                  %1636 = sbr.rel target = $region73
                $region78: #{tpu_custom_call.1} parent=70 // loop_exit
                  _
                %s1645 = ssub.s32 16, 1
                loop: start=0, step=1, limit=1
                $region79: #{tpu_custom_call.1} parent=70 // loop_pre_header
                  _
                $region80: #{tpu_custom_call.1} parent=70 // loop_header
                  %s1647 = sphi 0, %s1651
                  %p1648 = scmp.ge.s32.totalorder %s1647, 1
                  %s1652 = sphi %s1547, %s1547
                  %s1653 = sphi %s1553, %s1553
                $region81: #{tpu_custom_call.1} parent=70 // loop_header_branch
                  %1650 = sbr.rel (%p1648) target = $region85
                $region82: #{tpu_custom_call.1} parent=70 // loop_body
                  %v1654 = vld [vmem:[%s1652] sm:%s1645]
                  %1655 = vst [vmem:[%s1653] sm:%s1645] %v1654
                  %v1656 = vld [vmem:[%s1652 + $0x4] sm:%s1645]
                  %1657 = vst [vmem:[%s1653 + $0x4] sm:%s1645] %v1656
                  %v1658 = vld [vmem:[%s1652 + $0x8] sm:%s1645]
                  %1659 = vst [vmem:[%s1653 + $0x8] sm:%s1645] %v1658
                  %v1660 = vld [vmem:[%s1652 + $0xc] sm:%s1645]
                  %1661 = vst [vmem:[%s1653 + $0xc] sm:%s1645] %v1660
                  %v1662 = vld [vmem:[%s1652 + $0x10] sm:%s1645]
                  %1663 = vst [vmem:[%s1653 + $0x10] sm:%s1645] %v1662
                  %v1664 = vld [vmem:[%s1652 + $0x14] sm:%s1645]
                  %1665 = vst [vmem:[%s1653 + $0x14] sm:%s1645] %v1664
                  %v1666 = vld [vmem:[%s1652 + $0x18] sm:%s1645]
                  %1667 = vst [vmem:[%s1653 + $0x18] sm:%s1645] %v1666
                  %v1668 = vld [vmem:[%s1652 + $0x1c] sm:%s1645]
                  %1669 = vst [vmem:[%s1653 + $0x1c] sm:%s1645] %v1668
                  %v1670 = vld [vmem:[%s1652 + $0x20] sm:%s1645]
                  %1671 = vst [vmem:[%s1653 + $0x40] sm:%s1645] %v1670
                  %v1672 = vld [vmem:[%s1652 + $0x24] sm:%s1645]
                  %1673 = vst [vmem:[%s1653 + $0x44] sm:%s1645] %v1672
                  %v1674 = vld [vmem:[%s1652 + $0x28] sm:%s1645]
                  %1675 = vst [vmem:[%s1653 + $0x48] sm:%s1645] %v1674
                  %v1676 = vld [vmem:[%s1652 + $0x2c] sm:%s1645]
                  %1677 = vst [vmem:[%s1653 + $0x4c] sm:%s1645] %v1676
                  %v1678 = vld [vmem:[%s1652 + $0x30] sm:%s1645]
                  %1679 = vst [vmem:[%s1653 + $0x50] sm:%s1645] %v1678
                  %v1680 = vld [vmem:[%s1652 + $0x34] sm:%s1645]
                  %1681 = vst [vmem:[%s1653 + $0x54] sm:%s1645] %v1680
                  %v1682 = vld [vmem:[%s1652 + $0x38] sm:%s1645]
                  %1683 = vst [vmem:[%s1653 + $0x58] sm:%s1645] %v1682
                  %v1684 = vld [vmem:[%s1652 + $0x3c] sm:%s1645]
                  %1685 = vst [vmem:[%s1653 + $0x5c] sm:%s1645] %v1684
                  %v1686 = vld [vmem:[%s1652 + $0x40] sm:%s1645]
                  %1687 = vst [vmem:[%s1653 + $0x80] sm:%s1645] %v1686
                  %v1688 = vld [vmem:[%s1652 + $0x44] sm:%s1645]
                  %1689 = vst [vmem:[%s1653 + $0x84] sm:%s1645] %v1688
                  %v1690 = vld [vmem:[%s1652 + $0x48] sm:%s1645]
                  %1691 = vst [vmem:[%s1653 + $0x88] sm:%s1645] %v1690
                  %v1692 = vld [vmem:[%s1652 + $0x4c] sm:%s1645]
                  %1693 = vst [vmem:[%s1653 + $0x8c] sm:%s1645] %v1692
                  %v1694 = vld [vmem:[%s1652 + $0x50] sm:%s1645]
                  %1695 = vst [vmem:[%s1653 + $0x90] sm:%s1645] %v1694
                  %v1696 = vld [vmem:[%s1652 + $0x54] sm:%s1645]
                  %1697 = vst [vmem:[%s1653 + $0x94] sm:%s1645] %v1696
                  %v1698 = vld [vmem:[%s1652 + $0x58] sm:%s1645]
                  %1699 = vst [vmem:[%s1653 + $0x98] sm:%s1645] %v1698
                  %v1700 = vld [vmem:[%s1652 + $0x5c] sm:%s1645]
                  %1701 = vst [vmem:[%s1653 + $0x9c] sm:%s1645] %v1700
                  %v1702 = vld [vmem:[%s1652 + $0x60] sm:%s1645]
                  %1703 = vst [vmem:[%s1653 + $0xc0] sm:%s1645] %v1702
                  %v1704 = vld [vmem:[%s1652 + $0x64] sm:%s1645]
                  %1705 = vst [vmem:[%s1653 + $0xc4] sm:%s1645] %v1704
                  %v1706 = vld [vmem:[%s1652 + $0x68] sm:%s1645]
                  %1707 = vst [vmem:[%s1653 + $0xc8] sm:%s1645] %v1706
                  %v1708 = vld [vmem:[%s1652 + $0x6c] sm:%s1645]
                  %1709 = vst [vmem:[%s1653 + $0xcc] sm:%s1645] %v1708
                  %v1710 = vld [vmem:[%s1652 + $0x70] sm:%s1645]
                  %1711 = vst [vmem:[%s1653 + $0xd0] sm:%s1645] %v1710
                  %v1712 = vld [vmem:[%s1652 + $0x74] sm:%s1645]
                  %1713 = vst [vmem:[%s1653 + $0xd4] sm:%s1645] %v1712
                  %v1714 = vld [vmem:[%s1652 + $0x78] sm:%s1645]
                  %1715 = vst [vmem:[%s1653 + $0xd8] sm:%s1645] %v1714
                  %v1716 = vld [vmem:[%s1652 + $0x7c] sm:%s1645]
                  %1717 = vst [vmem:[%s1653 + $0xdc] sm:%s1645] %v1716
                $region83: #{tpu_custom_call.1} parent=70 // loop_footer
                  %s1651 = sadd.s32 1, %s1647
                $region84: #{tpu_custom_call.1} parent=70 // loop_footer_branch
                  %1646 = sbr.rel target = $region80
                $region85: #{tpu_custom_call.1} parent=70 // loop_exit
                  _
              $region71: #{tpu_custom_call.1} parent=55 // pred_fallthru
                _
            $region56: #{tpu_custom_call.1} parent=51 // pred_fallthru
              _
            // Predicated region
            $region57: #{tpu_custom_call.1} parent=51 // pred_check
              _
            $region58: #{tpu_custom_call.1} parent=51 // pred_check_branch
              %1559 = sbr.rel (0) target = $region60
            $region59: #{tpu_custom_call.1} parent=51 // pred_region
              %s1561 = ssub.s32 16, 1
              loop: start=0, step=1, limit=1
              $region61: #{tpu_custom_call.1} parent=59 // loop_pre_header
                _
              $region62: #{tpu_custom_call.1} parent=59 // loop_header
                %s1563 = sphi 0, %s1567
                %p1564 = scmp.ge.s32.totalorder %s1563, 1
                %s1568 = sphi %s1547, %s1547
                %s1569 = sphi %s1553, %s1553
              $region63: #{tpu_custom_call.1} parent=59 // loop_header_branch
                %1566 = sbr.rel (%p1564) target = $region67
              $region64: #{tpu_custom_call.1} parent=59 // loop_body
                %v1570 = vld [vmem:[%s1568] sm:%s1561]
                %1571 = vst [vmem:[%s1569] sm:%s1561] %v1570
                %v1572 = vld [vmem:[%s1568 + $0x4] sm:%s1561]
                %1573 = vst [vmem:[%s1569 + $0x4] sm:%s1561] %v1572
                %v1574 = vld [vmem:[%s1568 + $0x8] sm:%s1561]
                %1575 = vst [vmem:[%s1569 + $0x8] sm:%s1561] %v1574
                %v1576 = vld [vmem:[%s1568 + $0xc] sm:%s1561]
                %1577 = vst [vmem:[%s1569 + $0xc] sm:%s1561] %v1576
                %v1578 = vld [vmem:[%s1568 + $0x10] sm:%s1561]
                %1579 = vst [vmem:[%s1569 + $0x10] sm:%s1561] %v1578
                %v1580 = vld [vmem:[%s1568 + $0x14] sm:%s1561]
                %1581 = vst [vmem:[%s1569 + $0x14] sm:%s1561] %v1580
                %v1582 = vld [vmem:[%s1568 + $0x18] sm:%s1561]
                %1583 = vst [vmem:[%s1569 + $0x18] sm:%s1561] %v1582
                %v1584 = vld [vmem:[%s1568 + $0x1c] sm:%s1561]
                %1585 = vst [vmem:[%s1569 + $0x1c] sm:%s1561] %v1584
                %v1586 = vld [vmem:[%s1568 + $0x20] sm:%s1561]
                %1587 = vst [vmem:[%s1569 + $0x40] sm:%s1561] %v1586
                %v1588 = vld [vmem:[%s1568 + $0x24] sm:%s1561]
                %1589 = vst [vmem:[%s1569 + $0x44] sm:%s1561] %v1588
                %v1590 = vld [vmem:[%s1568 + $0x28] sm:%s1561]
                %1591 = vst [vmem:[%s1569 + $0x48] sm:%s1561] %v1590
                %v1592 = vld [vmem:[%s1568 + $0x2c] sm:%s1561]
                %1593 = vst [vmem:[%s1569 + $0x4c] sm:%s1561] %v1592
                %v1594 = vld [vmem:[%s1568 + $0x30] sm:%s1561]
                %1595 = vst [vmem:[%s1569 + $0x50] sm:%s1561] %v1594
                %v1596 = vld [vmem:[%s1568 + $0x34] sm:%s1561]
                %1597 = vst [vmem:[%s1569 + $0x54] sm:%s1561] %v1596
                %v1598 = vld [vmem:[%s1568 + $0x38] sm:%s1561]
                %1599 = vst [vmem:[%s1569 + $0x58] sm:%s1561] %v1598
                %v1600 = vld [vmem:[%s1568 + $0x3c] sm:%s1561]
                %1601 = vst [vmem:[%s1569 + $0x5c] sm:%s1561] %v1600
                %v1602 = vld [vmem:[%s1568 + $0x40] sm:%s1561]
                %1603 = vst [vmem:[%s1569 + $0x80] sm:%s1561] %v1602
                %v1604 = vld [vmem:[%s1568 + $0x44] sm:%s1561]
                %1605 = vst [vmem:[%s1569 + $0x84] sm:%s1561] %v1604
                %v1606 = vld [vmem:[%s1568 + $0x48] sm:%s1561]
                %1607 = vst [vmem:[%s1569 + $0x88] sm:%s1561] %v1606
                %v1608 = vld [vmem:[%s1568 + $0x4c] sm:%s1561]
                %1609 = vst [vmem:[%s1569 + $0x8c] sm:%s1561] %v1608
                %v1610 = vld [vmem:[%s1568 + $0x50] sm:%s1561]
                %1611 = vst [vmem:[%s1569 + $0x90] sm:%s1561] %v1610
                %v1612 = vld [vmem:[%s1568 + $0x54] sm:%s1561]
                %1613 = vst [vmem:[%s1569 + $0x94] sm:%s1561] %v1612
                %v1614 = vld [vmem:[%s1568 + $0x58] sm:%s1561]
                %1615 = vst [vmem:[%s1569 + $0x98] sm:%s1561] %v1614
                %v1616 = vld [vmem:[%s1568 + $0x5c] sm:%s1561]
                %1617 = vst [vmem:[%s1569 + $0x9c] sm:%s1561] %v1616
                %v1618 = vld [vmem:[%s1568 + $0x60] sm:%s1561]
                %1619 = vst [vmem:[%s1569 + $0xc0] sm:%s1561] %v1618
                %v1620 = vld [vmem:[%s1568 + $0x64] sm:%s1561]
                %1621 = vst [vmem:[%s1569 + $0xc4] sm:%s1561] %v1620
                %v1622 = vld [vmem:[%s1568 + $0x68] sm:%s1561]
                %1623 = vst [vmem:[%s1569 + $0xc8] sm:%s1561] %v1622
                %v1624 = vld [vmem:[%s1568 + $0x6c] sm:%s1561]
                %1625 = vst [vmem:[%s1569 + $0xcc] sm:%s1561] %v1624
                %v1626 = vld [vmem:[%s1568 + $0x70] sm:%s1561]
                %1627 = vst [vmem:[%s1569 + $0xd0] sm:%s1561] %v1626
                %v1628 = vld [vmem:[%s1568 + $0x74] sm:%s1561]
                %1629 = vst [vmem:[%s1569 + $0xd4] sm:%s1561] %v1628
                %v1630 = vld [vmem:[%s1568 + $0x78] sm:%s1561]
                %1631 = vst [vmem:[%s1569 + $0xd8] sm:%s1561] %v1630
                %v1632 = vld [vmem:[%s1568 + $0x7c] sm:%s1561]
                %1633 = vst [vmem:[%s1569 + $0xdc] sm:%s1561] %v1632
              $region65: #{tpu_custom_call.1} parent=59 // loop_footer
                %s1567 = sadd.s32 1, %s1563
              $region66: #{tpu_custom_call.1} parent=59 // loop_footer_branch
                %1562 = sbr.rel target = $region62
              $region67: #{tpu_custom_call.1} parent=59 // loop_exit
                _
            $region60: #{tpu_custom_call.1} parent=51 // pred_fallthru
              _
          $region52: #{tpu_custom_call.1} parent=47 // pred_fallthru
            _
          %1718 = vnop
        $region48: #{tpu_custom_call.1} parent=43 // pred_fallthru
          _
      $region44: #{tpu_custom_call.1} parent=5 // pred_fallthru
        _
      %p1719 = scmp.le.s32.totalorder 2, %s12
      // Predicated region
      $region86: #{tpu_custom_call.1} parent=5 // pred_check
        %p1720 = pneg %p1719
      $region87: #{tpu_custom_call.1} parent=5 // pred_check_branch
        %1722 = sbr.rel (%p1720) target = $region89
      $region88: #{tpu_custom_call.1} parent=5 // pred_region
        %s1723 = ssub.s32 %s12, 2
        // Predicated region
        $region90: #{tpu_custom_call.1} parent=88 // pred_check
          %p1724 = pneg %p172
        $region91: #{tpu_custom_call.1} parent=88 // pred_check_branch
          %1726 = sbr.rel (%p1724) target = $region93
        $region92: #{tpu_custom_call.1} parent=88 // pred_region
          %s1727 = sand.u32 %s157, 1
          %s1728 = sand.u32 %s157, 1
          %s1729 = smul.addr %s1728, 128
          %s1730 = scalar_lea.vmem [#allocation2], %s1729
        $region93: #{tpu_custom_call.1} parent=88 // pred_fallthru
          _
      $region89: #{tpu_custom_call.1} parent=5 // pred_fallthru
        _
    $region6: #{tpu_custom_call.1} parent=1 // loop_footer
      %s16 = sadd.s32 1, %s12
    $region7: #{tpu_custom_call.1} parent=1 // loop_footer_branch
      %11 = sbr.rel target = $region3
    $region8: #{tpu_custom_call.1} parent=1 // loop_exit
      _

</llo_original>
